<compile_context>
chip_gen: v5e
topology: v5e:2x2
jax: 0.10.0
libtpu: 0.0.40
codegen_flags: <defaults>
</compile_context>

<pallas_src>
import functools

import jax
import jax.numpy as jnp
from jax.experimental import pallas as pl
from jax.experimental.pallas import tpu as pltpu


def fusion_kernel(xw_ref, wconv_ref, bconv_ref, whead_ref, bhead_ref,
                  main_ref, score_ref, s_ca_ref, s_c_ref, s_a_ref,
                  *, class_num, batches_per_block, t_tile, t_total):
    t = pl.program_id(1)
    n_t = pl.num_programs(1)

    @pl.when(t == 0)
    def _init():
        s_ca_ref[...] = jnp.zeros_like(s_ca_ref)
        s_c_ref[...] = jnp.zeros_like(s_c_ref)
        s_a_ref[...] = jnp.zeros_like(s_a_ref)

    # Fused conv for BOTH streams as one MXU matmul: (rows, K*2F) @ (K*2F, 2C).
    emb = jnp.dot(xw_ref[...], wconv_ref[...],
                  preferred_element_type=jnp.float32)
    emb = jnp.maximum(emb + bconv_ref[...], 0.0)                       # (rows, 2C) f32

    # Fused cls+att heads of both streams, padded lane-dense: (rows, 2C) @ (2C, Npad).
    head = jnp.dot(emb.astype(whead_ref.dtype), whead_ref[...],
                   preferred_element_type=jnp.float32) + bhead_ref[...]  # (rows, Npad)

    # Both per-stream attention sigmoids in ONE EUP pass, then average.
    sig = jax.nn.sigmoid(head[:, class_num:class_num + 2])            # (rows, 2)
    att = 0.5 * (sig[:, :1] + sig[:, 1:2])                            # (rows, 1)

    # Lane-dense 128-wide store: cols [0, class_num) already hold the averaged cas;
    # overwrite col class_num with att via an iota select (no concat / relayout).
    col = jax.lax.broadcasted_iota(jnp.int32, head.shape, 1)
    main_ref[...] = jnp.where(col == class_num, att, head)

    # Per-batch partial reductions over this T tile (lanes >= class_num carry junk
    # that the wrapper slices off).
    npad = head.shape[-1]
    cas3 = head.reshape(batches_per_block, t_tile, npad)
    att3 = att.reshape(batches_per_block, t_tile, 1)
    s_ca_ref[...] += jnp.sum(cas3 * att3, axis=1)                     # sum(cas*att)
    s_c_ref[...] += jnp.sum(cas3, axis=1)                             # sum(cas)
    s_a_ref[...] += jnp.sum(att3, axis=1)                             # sum(att)

    @pl.when(t == n_t - 1)
    def _finalize():
        sum_att = s_a_ref[...]                                        # (bB, 1)
        clf = s_ca_ref[...] / (sum_att + 1.0)
        bg = (s_c_ref[...] - s_ca_ref[...]) / ((float(t_total) - sum_att) + 1e-6)
        score_ref[:, 0, :] = clf
        score_ref[:, 1, :] = bg


def _choose_tiles(B, T, KF2, Npad, in_itemsize, vmem_block_budget=8 * 1024 * 1024):
    """Pick (batches_per_block, T_tile).

    Small problems: fold every batch and the whole T into ONE grid step (per-step
    pipeline overhead dominates at toy sizes).  Large problems: one batch per
    block and tile T (the kernel carries the T reductions in VMEM accumulators),
    keeping per-step x_win/main blocks under a VMEM budget so the pipeline stays
    double-buffered without blowing the scoped VMEM limit (esp. v7x's 64 MiB).
    """
    row_bytes = KF2 * in_itemsize + Npad * 4
    max_rows = max(8, vmem_block_budget // max(row_bytes, 1))
    if B * T <= max_rows:
        return B, T
    t_tile = T
    cap = min(T, max_rows)
    for cand in range(cap - cap % 8, 7, -8):
        if T % cand == 0:
            t_tile = cand
            break
    return 1, t_tile


def fusion_forward(x, params, class_num, compute_dtype=jnp.bfloat16):
    """x: (B, in_features, T) float32 (PyTorch NCL layout)."""
    B, F2, T = x.shape
    F = F2 // 2

    (cw_r, cb_r, clsw_r, clsb_r, attw_r, attb_r,
     cw_f, cb_f, clsw_f, clsb_f, attw_f, attb_f) = params
    K, _, C = cw_r.shape
    C2 = 2 * C
    KF2 = K * 2 * F
    Npad = 128 * pl.cdiv(class_num + 2, 128)      # lane-dense head width

    # ---- Dropout2d -> identity (eval).  im2col with 'same' padding; rgb|flow
    # fused on lanes; batch folded into the matmul rows. ----
    xt = jnp.transpose(x, (0, 2, 1))                          # (B, T, 2F) = [rgb | flow]
    xp = jnp.pad(xt, ((0, 0), (1, 1), (0, 0)))                # pad=1 along T
    x_win = jnp.concatenate([xp[:, k:k + T, :] for k in range(K)], axis=-1)
    x_win = x_win.reshape(B * T, KF2).astype(compute_dtype)   # (B*T, K*2F)

    # ---- fused block-diagonal conv weight covering rgb AND flow: (K*2F, 2C) ----
    def blockdiag(a, b):
        fa, ca = a.shape
        fb, cb = b.shape
        top = jnp.concatenate([a, jnp.zeros((fa, cb), jnp.float32)], axis=1)
        bot = jnp.concatenate([jnp.zeros((fb, ca), jnp.float32), b], axis=1)
        return jnp.concatenate([top, bot], axis=0)

    w_conv = jnp.concatenate([blockdiag(cw_r[k], cw_f[k]) for k in range(K)], axis=0)
    b_conv = jnp.concatenate([cb_r, cb_f], axis=1)            # (1, 2C), kept f32

    # ---- fused head weight, zero-padded to Npad lane-dense columns ----
    # cols [0, class_num): 0.5*(cls_rgb + cls_flow)  (cas already averaged)
    # col class_num      : att_rgb pre-sigmoid
    # col class_num + 1  : att_flow pre-sigmoid
    # cols >= class_num+2: zeros
    pad = Npad - (class_num + 2)
    zc = jnp.zeros((C, 1), jnp.float32)
    zp = jnp.zeros((C, pad), jnp.float32)
    w_head = jnp.concatenate([
        jnp.concatenate([0.5 * clsw_r, attw_r, zc, zp], axis=1),   # rows 0:C   (emb_rgb)
        jnp.concatenate([0.5 * clsw_f, zc, attw_f, zp], axis=1),   # rows C:2C  (emb_flow)
    ], axis=0)                                                # (2C, Npad)
    b_head = jnp.concatenate(
        [0.5 * (clsb_r + clsb_f), attb_r, attb_f, jnp.zeros((1, pad), jnp.float32)],
        axis=1)                                               # (1, Npad), kept f32

    w_conv = w_conv.astype(compute_dtype)
    w_head = w_head.astype(compute_dtype)

    # ---- tiling: fold B*T rows into as few grid steps as fit in VMEM ----
    bB, tT = _choose_tiles(B, T, KF2, Npad, jnp.dtype(compute_dtype).itemsize)
    nG, nT = B // bB, T // tT
    rows_blk = bB * tT
    row_map = lambda g, t: (g * nT + t, 0)

    kernel = functools.partial(fusion_kernel, class_num=class_num,
                               batches_per_block=bB, t_tile=tT, t_total=T)

    def build(weight_mode):
        const = lambda shape: pl.BlockSpec(shape, lambda g, t: (0,) * len(shape),
                                           pipeline_mode=weight_mode)
        return pl.pallas_call(
            kernel,
            out_shape=[
                jax.ShapeDtypeStruct((B * T, Npad), jnp.float32),   # [cas | att | pad]
                jax.ShapeDtypeStruct((B, 2, Npad), jnp.float32),    # [clf ; bg]
            ],
            grid_spec=pltpu.PrefetchScalarGridSpec(
                num_scalar_prefetch=0,
                grid=(nG, nT),
                in_specs=[
                    pl.BlockSpec((rows_blk, KF2), row_map),         # folded x_win rows
                    const((KF2, C2)),                               # fused conv weight
                    const((1, C2)),                                 # fused conv bias
                    const((C2, Npad)),                              # fused head weight
                    const((1, Npad)),                               # fused head bias
                ],
                out_specs=[
                    pl.BlockSpec((rows_blk, Npad), row_map),
                    pl.BlockSpec((bB, 2, Npad), lambda g, t: (g, 0, 0)),
                ],
                scratch_shapes=[
                    pltpu.VMEM((bB, Npad), jnp.float32),            # sum(cas*att)
                    pltpu.VMEM((bB, Npad), jnp.float32),            # sum(cas)
                    pltpu.VMEM((bB, 1), jnp.float32),               # sum(att)
                ]),
            compiler_params=pltpu.CompilerParams(
                dimension_semantics=("parallel", "arbitrary")),
        )

    try:
        # Constant-index weights never change across grid steps -> single-buffer
        # them so they don't burn a second pipeline buffer of VMEM.
        main, scores = build(pl.Buffered(1))(x_win, w_conv, b_conv, w_head, b_head)
    except Exception:
        # pipeline_mode=Buffered(1) unsupported on this jax build; default buffering.
        main, scores = build(None)(x_win, w_conv, b_conv, w_head, b_head)

    main = main.reshape(B, T, Npad)
    return {"cas": main[:, :, :class_num],
            "att": main[:, :, class_num:class_num + 1],
            "clf": scores[:, 0, :class_num],
            "bg": scores[:, 1, :class_num]}


def make_params(key, feature, class_num, c_out, k):
    """Deterministic synthetic weights.  Conv stored (K, C_in, C_out); linears (in, out)."""
    keys = jax.random.split(key, 12)
    scale = 0.1

    def mk(i, shape):
        return (scale * jax.random.normal(keys[i], shape)).astype(jnp.float32)

    params = []
    for s in range(2):  # rgb, flow
        o = s * 6
        conv_w = mk(o + 0, (k, feature, c_out))
        conv_b = mk(o + 1, (1, c_out))
        cls_w = mk(o + 2, (c_out, class_num))
        cls_b = mk(o + 3, (1, class_num))
        att_w = mk(o + 4, (c_out, 1))
        att_b = mk(o + 5, (1, 1))
        params += [conv_w, conv_b, cls_w, cls_b, att_w, att_b]
    return tuple(params)


def reference_forward(x, params, class_num):
    """Pure-JAX reference mirroring the PyTorch module (eval mode)."""
    B, F2, T = x.shape
    F = F2 // 2
    (cw_r, cb_r, clsw_r, clsb_r, attw_r, attb_r,
     cw_f, cb_f, clsw_f, clsb_f, attw_f, attb_f) = params

    def backbone(x_ncl, cw, cb, clsw, clsb, attw, attb):
        xt = jnp.transpose(x_ncl, (0, 2, 1))                  # (B, T, F)
        xp = jnp.pad(xt, ((0, 0), (1, 1), (0, 0)))            # pad=1 along T
        k = cw.shape[0]
        emb = cb[None]
        for kk in range(k):
            emb = emb + jnp.einsum("btf,fc->btc", xp[:, kk:kk + T, :], cw[kk])
        emb = jnp.maximum(emb, 0.0)
        cas = jnp.einsum("btc,cn->btn", emb, clsw) + clsb[None]
        att = jax.nn.sigmoid(jnp.einsum("btc,cn->btn", emb, attw) + attb[None])
        return cas, att

    cas1, att1 = backbone(x[:, :F, :], cw_r, cb_r, clsw_r, clsb_r, attw_r, attb_r)
    cas2, att2 = backbone(x[:, F:, :], cw_f, cb_f, clsw_f, clsb_f, attw_f, attb_f)
    cas = (cas1 + cas2) / 2
    att = (att1 + att2) / 2
    clf = (cas * att).sum(axis=1) / (att.sum(axis=1) + 1)
    bg = (cas * (1 - att)).sum(axis=1) / ((1 - att).sum(axis=1) + 1e-6)
    return {"cas": cas, "att": att, "clf": clf, "bg": bg}


if __name__ == "__main__":
    # Small shapes consistent with the module:
    B, in_features, T = 2, 8, 16
    class_num = 6
    layer_params = [(32, 3)]          # (C_out, kernel_size) with padding=1
    feature = in_features // 2
    c_out, k = layer_params[-1]

    key = jax.random.PRNGKey(0)
    kx, kp = jax.random.split(key)
    x = jax.random.normal(kx, (B, in_features, T), dtype=jnp.float32)
    params = make_params(kp, feature, class_num, c_out, k)

    ref = reference_forward(x, params, class_num)

    # f32 compute path: tight tolerance.
    out_f32 = jax.block_until_ready(
        fusion_forward(x, params, class_num, compute_dtype=jnp.float32))
    for name in ("cas", "att", "clf", "bg"):
        assert out_f32[name].shape == ref[name].shape, (name, out_f32[name].shape,
                                                        ref[name].shape)
        assert jnp.allclose(out_f32[name], ref[name], atol=1e-4, rtol=1e-4), name

    # Default bf16 compute path (f32 MXU accumulation): looser tolerance.
    out_bf16 = jax.block_until_ready(fusion_forward(x, params, class_num))
    for name in ("cas", "att", "clf", "bg"):
        assert out_bf16[name].shape == ref[name].shape, name
        assert jnp.allclose(out_bf16[name], ref[name], atol=2.5e-2, rtol=2.5e-2), name

    print("KERNEL_OK")
</pallas_src>

<mosaic_0001>
module attributes {stable_mosaic.version = 11 : i64} {
  func.func @fusion_kernel(%arg0: i32, %arg1: i32, %arg2: memref<32x24xf32, #tpu.memory_space<vmem>>, %arg3: memref<24x64xf32, #tpu.memory_space<vmem>>, %arg4: memref<1x64xf32, #tpu.memory_space<vmem>>, %arg5: memref<64x128xf32, #tpu.memory_space<vmem>>, %arg6: memref<1x128xf32, #tpu.memory_space<vmem>>, %arg7: memref<32x128xf32, #tpu.memory_space<vmem>>, %arg8: memref<2x2x128xf32, #tpu.memory_space<vmem>>, %arg9: memref<2x128xf32, #tpu.memory_space<vmem>>, %arg10: memref<2x128xf32, #tpu.memory_space<vmem>>, %arg11: memref<2x1xf32, #tpu.memory_space<vmem>>) attributes {dimension_semantics = [#tpu.dimension_semantics<parallel>, #tpu.dimension_semantics<arbitrary>], iteration_bounds = array<i64: 1, 1>, scalar_prefetch = 0 : i64, scratch_operands = 3 : i64, tpu.core_type = #tpu.core_type<tc>, window_params = [{transform_indices = @transform_0, window_bounds = array<i64: 32, 24>}, {pipeline_mode = #tpu.pipeline_mode<synchronous>, transform_indices = @transform_1, window_bounds = array<i64: 24, 64>}, {pipeline_mode = #tpu.pipeline_mode<synchronous>, transform_indices = @transform_2, window_bounds = array<i64: 1, 64>}, {pipeline_mode = #tpu.pipeline_mode<synchronous>, transform_indices = @transform_3, window_bounds = array<i64: 64, 128>}, {pipeline_mode = #tpu.pipeline_mode<synchronous>, transform_indices = @transform_4, window_bounds = array<i64: 1, 128>}, {transform_indices = @transform_5, window_bounds = array<i64: 32, 128>}, {transform_indices = @transform_6, window_bounds = array<i64: 2, 2, 128>}]} {
    %c0_i32 = arith.constant 0 : i32
    %0 = arith.cmpi eq, %arg1, %c0_i32 : i32
    %1 = arith.extui %0 : i1 to i32
    %c0_i32_0 = arith.constant 0 : i32
    %2 = arith.cmpi ne, %1, %c0_i32_0 : i32
    scf.if %2 {
      %cst_33 = arith.constant 0.000000e+00 : f32
      %53 = vector.broadcast %cst_33 : f32 to vector<2x128xf32>
      %c0_34 = arith.constant 0 : index
      %c0_35 = arith.constant 0 : index
      %54 = vector.load %arg9[%c0_34, %c0_35] : memref<2x128xf32, #tpu.memory_space<vmem>>, vector<2x128xf32>
      tpu.vector_store %arg9[%c0_34, %c0_35], %53 {strides = array<i32>} : memref<2x128xf32, #tpu.memory_space<vmem>>, vector<2x128xf32>,
      %cst_36 = arith.constant 0.000000e+00 : f32
      %55 = vector.broadcast %cst_36 : f32 to vector<2x128xf32>
      %c0_37 = arith.constant 0 : index
      %c0_38 = arith.constant 0 : index
      %56 = vector.load %arg10[%c0_37, %c0_38] : memref<2x128xf32, #tpu.memory_space<vmem>>, vector<2x128xf32>
      tpu.vector_store %arg10[%c0_37, %c0_38], %55 {strides = array<i32>} : memref<2x128xf32, #tpu.memory_space<vmem>>, vector<2x128xf32>,
      %cst_39 = arith.constant 0.000000e+00 : f32
      %57 = vector.broadcast %cst_39 : f32 to vector<2x1xf32>
      %c0_40 = arith.constant 0 : index
      %c0_41 = arith.constant 0 : index
      %58 = vector.load %arg11[%c0_40, %c0_41] : memref<2x1xf32, #tpu.memory_space<vmem>>, vector<2x1xf32>
      tpu.vector_store %arg11[%c0_40, %c0_41], %57 {strides = array<i32>} : memref<2x1xf32, #tpu.memory_space<vmem>>, vector<2x1xf32>,
    } else {
    }
    %c0 = arith.constant 0 : index
    %c0_1 = arith.constant 0 : index
    %3 = vector.load %arg2[%c0, %c0_1] : memref<32x24xf32, #tpu.memory_space<vmem>>, vector<32x24xf32>
    %c0_2 = arith.constant 0 : index
    %c0_3 = arith.constant 0 : index
    %4 = vector.load %arg3[%c0_2, %c0_3] : memref<24x64xf32, #tpu.memory_space<vmem>>, vector<24x64xf32>
    %cst = arith.constant dense<0.000000e+00> : vector<32x64xf32>
    %5 = tpu.matmul %3, %4, %cst {dimension_numbers = #tpu.dot_dimension_numbers<[1], [0], [0], [1], [0, 0, 1, 1], [], []>} : vector<32x24xf32>, vector<24x64xf32>, vector<32x64xf32> -> vector<32x64xf32>
    %c0_4 = arith.constant 0 : index
    %c0_5 = arith.constant 0 : index
    %6 = vector.load %arg4[%c0_4, %c0_5] : memref<1x64xf32, #tpu.memory_space<vmem>>, vector<1x64xf32>
    %7 = vector.broadcast %6 : vector<1x64xf32> to vector<32x64xf32>
    %8 = arith.addf %5, %7 : vector<32x64xf32>
    %cst_6 = arith.constant 0.000000e+00 : f32
    %9 = vector.broadcast %cst_6 : f32 to vector<32x64xf32>
    %10 = arith.maximumf %8, %9 : vector<32x64xf32>
    %c0_7 = arith.constant 0 : index
    %c0_8 = arith.constant 0 : index
    %11 = vector.load %arg5[%c0_7, %c0_8] : memref<64x128xf32, #tpu.memory_space<vmem>>, vector<64x128xf32>
    %cst_9 = arith.constant dense<0.000000e+00> : vector<32x128xf32>
    %12 = tpu.matmul %10, %11, %cst_9 {dimension_numbers = #tpu.dot_dimension_numbers<[1], [0], [0], [1], [0, 0, 1, 1], [], []>} : vector<32x64xf32>, vector<64x128xf32>, vector<32x128xf32> -> vector<32x128xf32>
    %c0_10 = arith.constant 0 : index
    %c0_11 = arith.constant 0 : index
    %13 = vector.load %arg6[%c0_10, %c0_11] : memref<1x128xf32, #tpu.memory_space<vmem>>, vector<1x128xf32>
    %14 = vector.broadcast %13 : vector<1x128xf32> to vector<32x128xf32>
    %15 = arith.addf %12, %14 : vector<32x128xf32>
    %16 = vector.extract_strided_slice %15 {offsets = [0, 6], sizes = [32, 2], strides = [1, 1]} : vector<32x128xf32> to vector<32x2xf32>
    %17 = arith.negf %16 : vector<32x2xf32>
    %18 = math.exp %17 : vector<32x2xf32>
    %cst_12 = arith.constant 1.000000e+00 : f32
    %19 = vector.broadcast %cst_12 : f32 to vector<32x2xf32>
    %20 = arith.addf %19, %18 : vector<32x2xf32>
    %21 = arith.divf %19, %20 : vector<32x2xf32>
    %22 = vector.extract_strided_slice %21 {offsets = [0, 0], sizes = [32, 1], strides = [1, 1]} : vector<32x2xf32> to vector<32x1xf32>
    %23 = vector.extract_strided_slice %21 {offsets = [0, 1], sizes = [32, 1], strides = [1, 1]} : vector<32x2xf32> to vector<32x1xf32>
    %24 = arith.addf %22, %23 : vector<32x1xf32>
    %cst_13 = arith.constant 5.000000e-01 : f32
    %25 = vector.broadcast %cst_13 : f32 to vector<32x1xf32>
    %26 = arith.mulf %25, %24 : vector<32x1xf32>
    %27 = tpu.iota {dimensions = array<i32: 1>} : vector<32x128xi32>
    %c6_i32 = arith.constant 6 : i32
    %28 = vector.broadcast %c6_i32 : i32 to vector<32x128xi32>
    %29 = arith.cmpi eq, %27, %28 : vector<32x128xi32>
    %30 = vector.shape_cast %26 : vector<32x1xf32> to vector<32x1xf32>
    %31 = vector.broadcast %30 : vector<32x1xf32> to vector<32x128xf32>
    %32 = arith.select %29, %31, %15 : vector<32x128xi1>, vector<32x128xf32>
    %c0_14 = arith.constant 0 : index
    %c0_15 = arith.constant 0 : index
    %33 = vector.load %arg7[%c0_14, %c0_15] : memref<32x128xf32, #tpu.memory_space<vmem>>, vector<32x128xf32>
    tpu.vector_store %arg7[%c0_14, %c0_15], %32 {strides = array<i32>} : memref<32x128xf32, #tpu.memory_space<vmem>>, vector<32x128xf32>,
    %34 = vector.shape_cast %15 : vector<32x128xf32> to vector<2x16x128xf32>
    %35 = vector.shape_cast %26 : vector<32x1xf32> to vector<2x16x1xf32>
    %c0_16 = arith.constant 0 : index
    %c0_17 = arith.constant 0 : index
    %36 = vector.load %arg9[%c0_16, %c0_17] : memref<2x128xf32, #tpu.memory_space<vmem>>, vector<2x128xf32>
    %37 = vector.broadcast %35 : vector<2x16x1xf32> to vector<2x16x128xf32>
    %38 = arith.mulf %34, %37 : vector<2x16x128xf32>
    %cst_18 = arith.constant dense<0.000000e+00> : vector<2x128xf32>
    %39 = vector.multi_reduction <add>, %38, %cst_18 [1] : vector<2x16x128xf32> to vector<2x128xf32>
    %40 = arith.addf %36, %39 : vector<2x128xf32>
    %c0_19 = arith.constant 0 : index
    %c0_20 = arith.constant 0 : index
    %41 = vector.load %arg9[%c0_19, %c0_20] : memref<2x128xf32, #tpu.memory_space<vmem>>, vector<2x128xf32>
    tpu.vector_store %arg9[%c0_19, %c0_20], %40 {strides = array<i32>} : memref<2x128xf32, #tpu.memory_space<vmem>>, vector<2x128xf32>,
    %c0_21 = arith.constant 0 : index
    %c0_22 = arith.constant 0 : index
    %42 = vector.load %arg10[%c0_21, %c0_22] : memref<2x128xf32, #tpu.memory_space<vmem>>, vector<2x128xf32>
    %cst_23 = arith.constant dense<0.000000e+00> : vector<2x128xf32>
    %43 = vector.multi_reduction <add>, %34, %cst_23 [1] : vector<2x16x128xf32> to vector<2x128xf32>
    %44 = arith.addf %42, %43 : vector<2x128xf32>
    %c0_24 = arith.constant 0 : index
    %c0_25 = arith.constant 0 : index
    %45 = vector.load %arg10[%c0_24, %c0_25] : memref<2x128xf32, #tpu.memory_space<vmem>>, vector<2x128xf32>
    tpu.vector_store %arg10[%c0_24, %c0_25], %44 {strides = array<i32>} : memref<2x128xf32, #tpu.memory_space<vmem>>, vector<2x128xf32>,
    %c0_26 = arith.constant 0 : index
    %c0_27 = arith.constant 0 : index
    %46 = vector.load %arg11[%c0_26, %c0_27] : memref<2x1xf32, #tpu.memory_space<vmem>>, vector<2x1xf32>
    %cst_28 = arith.constant dense<0.000000e+00> : vector<2x1xf32>
    %47 = vector.multi_reduction <add>, %35, %cst_28 [1] : vector<2x16x1xf32> to vector<2x1xf32>
    %48 = arith.addf %46, %47 : vector<2x1xf32>
    %c0_29 = arith.constant 0 : index
    %c0_30 = arith.constant 0 : index
    %49 = vector.load %arg11[%c0_29, %c0_30] : memref<2x1xf32, #tpu.memory_space<vmem>>, vector<2x1xf32>
    tpu.vector_store %arg11[%c0_29, %c0_30], %48 {strides = array<i32>} : memref<2x1xf32, #tpu.memory_space<vmem>>, vector<2x1xf32>,
    %c0_i32_31 = arith.constant 0 : i32
    %50 = arith.cmpi eq, %arg1, %c0_i32_31 : i32
    %51 = arith.extui %50 : i1 to i32
    %c0_i32_32 = arith.constant 0 : i32
    %52 = arith.cmpi ne, %51, %c0_i32_32 : i32
    scf.if %52 {
      %c0_33 = arith.constant 0 : index
      %c0_34 = arith.constant 0 : index
      %53 = vector.load %arg11[%c0_33, %c0_34] : memref<2x1xf32, #tpu.memory_space<vmem>>, vector<2x1xf32>
      %c0_35 = arith.constant 0 : index
      %c0_36 = arith.constant 0 : index
      %54 = vector.load %arg9[%c0_35, %c0_36] : memref<2x128xf32, #tpu.memory_space<vmem>>, vector<2x128xf32>
      %cst_37 = arith.constant 1.000000e+00 : f32
      %55 = vector.broadcast %cst_37 : f32 to vector<2x1xf32>
      %56 = arith.addf %53, %55 : vector<2x1xf32>
      %57 = vector.broadcast %56 : vector<2x1xf32> to vector<2x128xf32>
      %58 = arith.divf %54, %57 : vector<2x128xf32>
      %c0_38 = arith.constant 0 : index
      %c0_39 = arith.constant 0 : index
      %59 = vector.load %arg10[%c0_38, %c0_39] : memref<2x128xf32, #tpu.memory_space<vmem>>, vector<2x128xf32>
      %c0_40 = arith.constant 0 : index
      %c0_41 = arith.constant 0 : index
      %60 = vector.load %arg9[%c0_40, %c0_41] : memref<2x128xf32, #tpu.memory_space<vmem>>, vector<2x128xf32>
      %61 = arith.subf %59, %60 : vector<2x128xf32>
      %cst_42 = arith.constant 1.600000e+01 : f32
      %62 = vector.broadcast %cst_42 : f32 to vector<2x1xf32>
      %63 = arith.subf %62, %53 : vector<2x1xf32>
      %cst_43 = arith.constant 9.99999997E-7 : f32
      %64 = vector.broadcast %cst_43 : f32 to vector<2x1xf32>
      %65 = arith.addf %63, %64 : vector<2x1xf32>
      %66 = vector.broadcast %65 : vector<2x1xf32> to vector<2x128xf32>
      %67 = arith.divf %61, %66 : vector<2x128xf32>
      %c0_44 = arith.constant 0 : index
      %c0_45 = arith.constant 0 : index
      %c0_46 = arith.constant 0 : index
      %68 = vector.load %arg8[%c0_44, %c0_45, %c0_46] : memref<2x2x128xf32, #tpu.memory_space<vmem>>, vector<2x1x128xf32>
      %69 = vector.shape_cast %68 : vector<2x1x128xf32> to vector<2x128xf32>
      %70 = vector.shape_cast %58 : vector<2x128xf32> to vector<2x1x128xf32>
      tpu.vector_store %arg8[%c0_44, %c0_45, %c0_46], %70 {strides = array<i32>} : memref<2x2x128xf32, #tpu.memory_space<vmem>>, vector<2x1x128xf32>,
      %c0_47 = arith.constant 0 : index
      %c1 = arith.constant 1 : index
      %c0_48 = arith.constant 0 : index
      %71 = vector.load %arg8[%c0_47, %c1, %c0_48] : memref<2x2x128xf32, #tpu.memory_space<vmem>>, vector<2x1x128xf32>
      %72 = vector.shape_cast %71 : vector<2x1x128xf32> to vector<2x128xf32>
      %73 = vector.shape_cast %67 : vector<2x128xf32> to vector<2x1x128xf32>
      tpu.vector_store %arg8[%c0_47, %c1, %c0_48], %73 {strides = array<i32>} : memref<2x2x128xf32, #tpu.memory_space<vmem>>, vector<2x1x128xf32>,
    } else {
    }
    return
  }
  func.func @transform_0(%arg0: i32, %arg1: i32) -> (i32, i32) {
    %c1_i32 = arith.constant 1 : i32
    %0 = arith.muli %arg0, %c1_i32 : i32
    %1 = arith.addi %0, %arg1 : i32
    %c0_i32 = arith.constant 0 : i32
    %c0_i32_0 = arith.constant 0 : i32
    return %1, %c0_i32 : i32, i32
  }
  func.func @transform_1(%arg0: i32, %arg1: i32) -> (i32, i32) {
    %c0_i32 = arith.constant 0 : i32
    %c0_i32_0 = arith.constant 0 : i32
    %c0_i32_1 = arith.constant 0 : i32
    return %c0_i32, %c0_i32_0 : i32, i32
  }
  func.func @transform_2(%arg0: i32, %arg1: i32) -> (i32, i32) {
    %c0_i32 = arith.constant 0 : i32
    %c0_i32_0 = arith.constant 0 : i32
    %c0_i32_1 = arith.constant 0 : i32
    return %c0_i32, %c0_i32_0 : i32, i32
  }
  func.func @transform_3(%arg0: i32, %arg1: i32) -> (i32, i32) {
    %c0_i32 = arith.constant 0 : i32
    %c0_i32_0 = arith.constant 0 : i32
    %c0_i32_1 = arith.constant 0 : i32
    return %c0_i32, %c0_i32_0 : i32, i32
  }
  func.func @transform_4(%arg0: i32, %arg1: i32) -> (i32, i32) {
    %c0_i32 = arith.constant 0 : i32
    %c0_i32_0 = arith.constant 0 : i32
    %c0_i32_1 = arith.constant 0 : i32
    return %c0_i32, %c0_i32_0 : i32, i32
  }
  func.func @transform_5(%arg0: i32, %arg1: i32) -> (i32, i32) {
    %c1_i32 = arith.constant 1 : i32
    %0 = arith.muli %arg0, %c1_i32 : i32
    %1 = arith.addi %0, %arg1 : i32
    %c0_i32 = arith.constant 0 : i32
    %c0_i32_0 = arith.constant 0 : i32
    return %1, %c0_i32 : i32, i32
  }
  func.func @transform_6(%arg0: i32, %arg1: i32) -> (i32, i32, i32) {
    %c0_i32 = arith.constant 0 : i32
    %c0_i32_0 = arith.constant 0 : i32
    %c0_i32_1 = arith.constant 0 : i32
    return %arg0, %c0_i32, %c0_i32_0 : i32, i32, i32
  }
}

module attributes {stable_mosaic.version = 11 : i64} {
  func.func @fusion_kernel(%arg0: i32, %arg1: i32, %arg2: memref<32x24xf32, #tpu.memory_space<vmem>>, %arg3: memref<24x64xf32, #tpu.memory_space<vmem>>, %arg4: memref<1x64xf32, #tpu.memory_space<vmem>>, %arg5: memref<64x128xf32, #tpu.memory_space<vmem>>, %arg6: memref<1x128xf32, #tpu.memory_space<vmem>>, %arg7: memref<32x128xf32, #tpu.memory_space<vmem>>, %arg8: memref<2x2x128xf32, #tpu.memory_space<vmem>>, %arg9: memref<2x128xf32, #tpu.memory_space<vmem>>, %arg10: memref<2x128xf32, #tpu.memory_space<vmem>>, %arg11: memref<2x1xf32, #tpu.memory_space<vmem>>) attributes {dimension_semantics = [#tpu.dimension_semantics<parallel>, #tpu.dimension_semantics<arbitrary>], iteration_bounds = array<i64: 1, 1>, scalar_prefetch = 0 : i64, scratch_operands = 3 : i64, tpu.core_type = #tpu.core_type<tc>, window_params = [{transform_indices = @transform_0, window_bounds = array<i64: 32, 24>}, {pipeline_mode = #tpu.pipeline_mode<synchronous>, transform_indices = @transform_1, window_bounds = array<i64: 24, 64>}, {pipeline_mode = #tpu.pipeline_mode<synchronous>, transform_indices = @transform_2, window_bounds = array<i64: 1, 64>}, {pipeline_mode = #tpu.pipeline_mode<synchronous>, transform_indices = @transform_3, window_bounds = array<i64: 64, 128>}, {pipeline_mode = #tpu.pipeline_mode<synchronous>, transform_indices = @transform_4, window_bounds = array<i64: 1, 128>}, {transform_indices = @transform_5, window_bounds = array<i64: 32, 128>}, {transform_indices = @transform_6, window_bounds = array<i64: 2, 2, 128>}]} {
    %c0_i32 = arith.constant 0 : i32
    %0 = arith.cmpi eq, %arg1, %c0_i32 : i32
    %1 = arith.extui %0 : i1 to i32
    %c0_i32_0 = arith.constant 0 : i32
    %2 = arith.cmpi ne, %1, %c0_i32_0 : i32
    scf.if %2 {
      %cst_33 = arith.constant 0.000000e+00 : f32
      %53 = vector.broadcast %cst_33 : f32 to vector<2x128xf32>
      %c0_34 = arith.constant 0 : index
      %c0_35 = arith.constant 0 : index
      %54 = vector.load %arg9[%c0_34, %c0_35] : memref<2x128xf32, #tpu.memory_space<vmem>>, vector<2x128xf32>
      tpu.vector_store %arg9[%c0_34, %c0_35], %53 {strides = array<i32>} : memref<2x128xf32, #tpu.memory_space<vmem>>, vector<2x128xf32>,
      %cst_36 = arith.constant 0.000000e+00 : f32
      %55 = vector.broadcast %cst_36 : f32 to vector<2x128xf32>
      %c0_37 = arith.constant 0 : index
      %c0_38 = arith.constant 0 : index
      %56 = vector.load %arg10[%c0_37, %c0_38] : memref<2x128xf32, #tpu.memory_space<vmem>>, vector<2x128xf32>
      tpu.vector_store %arg10[%c0_37, %c0_38], %55 {strides = array<i32>} : memref<2x128xf32, #tpu.memory_space<vmem>>, vector<2x128xf32>,
      %cst_39 = arith.constant 0.000000e+00 : f32
      %57 = vector.broadcast %cst_39 : f32 to vector<2x1xf32>
      %c0_40 = arith.constant 0 : index
      %c0_41 = arith.constant 0 : index
      %58 = vector.load %arg11[%c0_40, %c0_41] : memref<2x1xf32, #tpu.memory_space<vmem>>, vector<2x1xf32>
      tpu.vector_store %arg11[%c0_40, %c0_41], %57 {strides = array<i32>} : memref<2x1xf32, #tpu.memory_space<vmem>>, vector<2x1xf32>,
    } else {
    }
    %c0 = arith.constant 0 : index
    %c0_1 = arith.constant 0 : index
    %3 = vector.load %arg2[%c0, %c0_1] : memref<32x24xf32, #tpu.memory_space<vmem>>, vector<32x24xf32>
    %c0_2 = arith.constant 0 : index
    %c0_3 = arith.constant 0 : index
    %4 = vector.load %arg3[%c0_2, %c0_3] : memref<24x64xf32, #tpu.memory_space<vmem>>, vector<24x64xf32>
    %cst = arith.constant dense<0.000000e+00> : vector<32x64xf32>
    %5 = tpu.matmul %3, %4, %cst {dimension_numbers = #tpu.dot_dimension_numbers<[1], [0], [0], [1], [0, 0, 1, 1], [], []>} : vector<32x24xf32>, vector<24x64xf32>, vector<32x64xf32> -> vector<32x64xf32>
    %c0_4 = arith.constant 0 : index
    %c0_5 = arith.constant 0 : index
    %6 = vector.load %arg4[%c0_4, %c0_5] : memref<1x64xf32, #tpu.memory_space<vmem>>, vector<1x64xf32>
    %7 = vector.broadcast %6 : vector<1x64xf32> to vector<32x64xf32>
    %8 = arith.addf %5, %7 : vector<32x64xf32>
    %cst_6 = arith.constant 0.000000e+00 : f32
    %9 = vector.broadcast %cst_6 : f32 to vector<32x64xf32>
    %10 = arith.maximumf %8, %9 : vector<32x64xf32>
    %c0_7 = arith.constant 0 : index
    %c0_8 = arith.constant 0 : index
    %11 = vector.load %arg5[%c0_7, %c0_8] : memref<64x128xf32, #tpu.memory_space<vmem>>, vector<64x128xf32>
    %cst_9 = arith.constant dense<0.000000e+00> : vector<32x128xf32>
    %12 = tpu.matmul %10, %11, %cst_9 {dimension_numbers = #tpu.dot_dimension_numbers<[1], [0], [0], [1], [0, 0, 1, 1], [], []>} : vector<32x64xf32>, vector<64x128xf32>, vector<32x128xf32> -> vector<32x128xf32>
    %c0_10 = arith.constant 0 : index
    %c0_11 = arith.constant 0 : index
    %13 = vector.load %arg6[%c0_10, %c0_11] : memref<1x128xf32, #tpu.memory_space<vmem>>, vector<1x128xf32>
    %14 = vector.broadcast %13 : vector<1x128xf32> to vector<32x128xf32>
    %15 = arith.addf %12, %14 : vector<32x128xf32>
    %16 = vector.extract_strided_slice %15 {offsets = [0, 6], sizes = [32, 2], strides = [1, 1]} : vector<32x128xf32> to vector<32x2xf32>
    %17 = arith.negf %16 : vector<32x2xf32>
    %18 = math.exp %17 : vector<32x2xf32>
    %cst_12 = arith.constant 1.000000e+00 : f32
    %19 = vector.broadcast %cst_12 : f32 to vector<32x2xf32>
    %20 = arith.addf %19, %18 : vector<32x2xf32>
    %21 = arith.divf %19, %20 : vector<32x2xf32>
    %22 = vector.extract_strided_slice %21 {offsets = [0, 0], sizes = [32, 1], strides = [1, 1]} : vector<32x2xf32> to vector<32x1xf32>
    %23 = vector.extract_strided_slice %21 {offsets = [0, 1], sizes = [32, 1], strides = [1, 1]} : vector<32x2xf32> to vector<32x1xf32>
    %24 = arith.addf %22, %23 : vector<32x1xf32>
    %cst_13 = arith.constant 5.000000e-01 : f32
    %25 = vector.broadcast %cst_13 : f32 to vector<32x1xf32>
    %26 = arith.mulf %25, %24 : vector<32x1xf32>
    %27 = tpu.iota {dimensions = array<i32: 1>} : vector<32x128xi32>
    %c6_i32 = arith.constant 6 : i32
    %28 = vector.broadcast %c6_i32 : i32 to vector<32x128xi32>
    %29 = arith.cmpi eq, %27, %28 : vector<32x128xi32>
    %30 = vector.shape_cast %26 : vector<32x1xf32> to vector<32x1xf32>
    %31 = vector.broadcast %30 : vector<32x1xf32> to vector<32x128xf32>
    %32 = arith.select %29, %31, %15 : vector<32x128xi1>, vector<32x128xf32>
    %c0_14 = arith.constant 0 : index
    %c0_15 = arith.constant 0 : index
    %33 = vector.load %arg7[%c0_14, %c0_15] : memref<32x128xf32, #tpu.memory_space<vmem>>, vector<32x128xf32>
    tpu.vector_store %arg7[%c0_14, %c0_15], %32 {strides = array<i32>} : memref<32x128xf32, #tpu.memory_space<vmem>>, vector<32x128xf32>,
    %34 = vector.shape_cast %15 : vector<32x128xf32> to vector<2x16x128xf32>
    %35 = vector.shape_cast %26 : vector<32x1xf32> to vector<2x16x1xf32>
    %c0_16 = arith.constant 0 : index
    %c0_17 = arith.constant 0 : index
    %36 = vector.load %arg9[%c0_16, %c0_17] : memref<2x128xf32, #tpu.memory_space<vmem>>, vector<2x128xf32>
    %37 = vector.broadcast %35 : vector<2x16x1xf32> to vector<2x16x128xf32>
    %38 = arith.mulf %34, %37 : vector<2x16x128xf32>
    %cst_18 = arith.constant dense<0.000000e+00> : vector<2x128xf32>
    %39 = vector.multi_reduction <add>, %38, %cst_18 [1] : vector<2x16x128xf32> to vector<2x128xf32>
    %40 = arith.addf %36, %39 : vector<2x128xf32>
    %c0_19 = arith.constant 0 : index
    %c0_20 = arith.constant 0 : index
    %41 = vector.load %arg9[%c0_19, %c0_20] : memref<2x128xf32, #tpu.memory_space<vmem>>, vector<2x128xf32>
    tpu.vector_store %arg9[%c0_19, %c0_20], %40 {strides = array<i32>} : memref<2x128xf32, #tpu.memory_space<vmem>>, vector<2x128xf32>,
    %c0_21 = arith.constant 0 : index
    %c0_22 = arith.constant 0 : index
    %42 = vector.load %arg10[%c0_21, %c0_22] : memref<2x128xf32, #tpu.memory_space<vmem>>, vector<2x128xf32>
    %cst_23 = arith.constant dense<0.000000e+00> : vector<2x128xf32>
    %43 = vector.multi_reduction <add>, %34, %cst_23 [1] : vector<2x16x128xf32> to vector<2x128xf32>
    %44 = arith.addf %42, %43 : vector<2x128xf32>
    %c0_24 = arith.constant 0 : index
    %c0_25 = arith.constant 0 : index
    %45 = vector.load %arg10[%c0_24, %c0_25] : memref<2x128xf32, #tpu.memory_space<vmem>>, vector<2x128xf32>
    tpu.vector_store %arg10[%c0_24, %c0_25], %44 {strides = array<i32>} : memref<2x128xf32, #tpu.memory_space<vmem>>, vector<2x128xf32>,
    %c0_26 = arith.constant 0 : index
    %c0_27 = arith.constant 0 : index
    %46 = vector.load %arg11[%c0_26, %c0_27] : memref<2x1xf32, #tpu.memory_space<vmem>>, vector<2x1xf32>
    %cst_28 = arith.constant dense<0.000000e+00> : vector<2x1xf32>
    %47 = vector.multi_reduction <add>, %35, %cst_28 [1] : vector<2x16x1xf32> to vector<2x1xf32>
    %48 = arith.addf %46, %47 : vector<2x1xf32>
    %c0_29 = arith.constant 0 : index
    %c0_30 = arith.constant 0 : index
    %49 = vector.load %arg11[%c0_29, %c0_30] : memref<2x1xf32, #tpu.memory_space<vmem>>, vector<2x1xf32>
    tpu.vector_store %arg11[%c0_29, %c0_30], %48 {strides = array<i32>} : memref<2x1xf32, #tpu.memory_space<vmem>>, vector<2x1xf32>,
    %c0_i32_31 = arith.constant 0 : i32
    %50 = arith.cmpi eq, %arg1, %c0_i32_31 : i32
    %51 = arith.extui %50 : i1 to i32
    %c0_i32_32 = arith.constant 0 : i32
    %52 = arith.cmpi ne, %51, %c0_i32_32 : i32
    scf.if %52 {
      %c0_33 = arith.constant 0 : index
      %c0_34 = arith.constant 0 : index
      %53 = vector.load %arg11[%c0_33, %c0_34] : memref<2x1xf32, #tpu.memory_space<vmem>>, vector<2x1xf32>
      %c0_35 = arith.constant 0 : index
      %c0_36 = arith.constant 0 : index
      %54 = vector.load %arg9[%c0_35, %c0_36] : memref<2x128xf32, #tpu.memory_space<vmem>>, vector<2x128xf32>
      %cst_37 = arith.constant 1.000000e+00 : f32
      %55 = vector.broadcast %cst_37 : f32 to vector<2x1xf32>
      %56 = arith.addf %53, %55 : vector<2x1xf32>
      %57 = vector.broadcast %56 : vector<2x1xf32> to vector<2x128xf32>
      %58 = arith.divf %54, %57 : vector<2x128xf32>
      %c0_38 = arith.constant 0 : index
      %c0_39 = arith.constant 0 : index
      %59 = vector.load %arg10[%c0_38, %c0_39] : memref<2x128xf32, #tpu.memory_space<vmem>>, vector<2x128xf32>
      %c0_40 = arith.constant 0 : index
      %c0_41 = arith.constant 0 : index
      %60 = vector.load %arg9[%c0_40, %c0_41] : memref<2x128xf32, #tpu.memory_space<vmem>>, vector<2x128xf32>
      %61 = arith.subf %59, %60 : vector<2x128xf32>
      %cst_42 = arith.constant 1.600000e+01 : f32
      %62 = vector.broadcast %cst_42 : f32 to vector<2x1xf32>
      %63 = arith.subf %62, %53 : vector<2x1xf32>
      %cst_43 = arith.constant 9.99999997E-7 : f32
      %64 = vector.broadcast %cst_43 : f32 to vector<2x1xf32>
      %65 = arith.addf %63, %64 : vector<2x1xf32>
      %66 = vector.broadcast %65 : vector<2x1xf32> to vector<2x128xf32>
      %67 = arith.divf %61, %66 : vector<2x128xf32>
      %c0_44 = arith.constant 0 : index
      %c0_45 = arith.constant 0 : index
      %c0_46 = arith.constant 0 : index
      %68 = vector.load %arg8[%c0_44, %c0_45, %c0_46] : memref<2x2x128xf32, #tpu.memory_space<vmem>>, vector<2x1x128xf32>
      %69 = vector.shape_cast %68 : vector<2x1x128xf32> to vector<2x128xf32>
      %70 = vector.shape_cast %58 : vector<2x128xf32> to vector<2x1x128xf32>
      tpu.vector_store %arg8[%c0_44, %c0_45, %c0_46], %70 {strides = array<i32>} : memref<2x2x128xf32, #tpu.memory_space<vmem>>, vector<2x1x128xf32>,
      %c0_47 = arith.constant 0 : index
      %c1 = arith.constant 1 : index
      %c0_48 = arith.constant 0 : index
      %71 = vector.load %arg8[%c0_47, %c1, %c0_48] : memref<2x2x128xf32, #tpu.memory_space<vmem>>, vector<2x1x128xf32>
      %72 = vector.shape_cast %71 : vector<2x1x128xf32> to vector<2x128xf32>
      %73 = vector.shape_cast %67 : vector<2x128xf32> to vector<2x1x128xf32>
      tpu.vector_store %arg8[%c0_47, %c1, %c0_48], %73 {strides = array<i32>} : memref<2x2x128xf32, #tpu.memory_space<vmem>>, vector<2x1x128xf32>,
    } else {
    }
    return
  }
  func.func @transform_0(%arg0: i32, %arg1: i32) -> (i32, i32) {
    %c1_i32 = arith.constant 1 : i32
    %0 = arith.muli %arg0, %c1_i32 : i32
    %1 = arith.addi %0, %arg1 : i32
    %c0_i32 = arith.constant 0 : i32
    %c0_i32_0 = arith.constant 0 : i32
    return %1, %c0_i32 : i32, i32
  }
  func.func @transform_1(%arg0: i32, %arg1: i32) -> (i32, i32) {
    %c0_i32 = arith.constant 0 : i32
    %c0_i32_0 = arith.constant 0 : i32
    %c0_i32_1 = arith.constant 0 : i32
    return %c0_i32, %c0_i32_0 : i32, i32
  }
  func.func @transform_2(%arg0: i32, %arg1: i32) -> (i32, i32) {
    %c0_i32 = arith.constant 0 : i32
    %c0_i32_0 = arith.constant 0 : i32
    %c0_i32_1 = arith.constant 0 : i32
    return %c0_i32, %c0_i32_0 : i32, i32
  }
  func.func @transform_3(%arg0: i32, %arg1: i32) -> (i32, i32) {
    %c0_i32 = arith.constant 0 : i32
    %c0_i32_0 = arith.constant 0 : i32
    %c0_i32_1 = arith.constant 0 : i32
    return %c0_i32, %c0_i32_0 : i32, i32
  }
  func.func @transform_4(%arg0: i32, %arg1: i32) -> (i32, i32) {
    %c0_i32 = arith.constant 0 : i32
    %c0_i32_0 = arith.constant 0 : i32
    %c0_i32_1 = arith.constant 0 : i32
    return %c0_i32, %c0_i32_0 : i32, i32
  }
  func.func @transform_5(%arg0: i32, %arg1: i32) -> (i32, i32) {
    %c1_i32 = arith.constant 1 : i32
    %0 = arith.muli %arg0, %c1_i32 : i32
    %1 = arith.addi %0, %arg1 : i32
    %c0_i32 = arith.constant 0 : i32
    %c0_i32_0 = arith.constant 0 : i32
    return %1, %c0_i32 : i32, i32
  }
  func.func @transform_6(%arg0: i32, %arg1: i32) -> (i32, i32, i32) {
    %c0_i32 = arith.constant 0 : i32
    %c0_i32_0 = arith.constant 0 : i32
    %c0_i32_1 = arith.constant 0 : i32
    return %arg0, %c0_i32, %c0_i32_0 : i32, i32, i32
  }
}

</mosaic_0001>

<llo_original>
// kernel: tpu_custom_call.1
$region0: #{tpu_custom_call.1}
  #allocation0 [shape = 'u32[]', space=smem, size = 0x4, offset = 0x4, fixed_abs, tag = 'smem constant byte address 0x4 - core index']
  #allocation1 [shape = 'u32[72,128]{1,0:T(1,128)}', space=vmem, size = 0x9000, scoped, tag = 'internal scratch']
  #allocation2 [shape = 'f32[2,128]{1,0:T(2,128)}', space=vmem, size = 0x400, scoped, tag = 'scratch operand']
  #allocation3 [shape = 'f32[2,128]{1,0:T(2,128)}', space=vmem, size = 0x400, scoped, tag = 'scratch operand']
  #allocation4 [shape = 'f32[2,1]{1,0:T(2,128)}', space=vmem, size = 0x400, scoped, tag = 'scratch operand']
  %s0 = inlined_call_operand.vmem [shape: f32[32,24], index: 0, kind: input, shape index: {}]
  %s1 = inlined_call_operand.vmem [shape: f32[24,64], index: 1, kind: input, shape index: {}]
  %s2 = inlined_call_operand.vmem [shape: f32[1,64], index: 2, kind: input, shape index: {}]
  %s3 = inlined_call_operand.hbm [shape: f32[64,128], index: 3, kind: input, shape index: {}]
  %s4 = inlined_call_operand.vmem [shape: f32[1,128], index: 4, kind: input, shape index: {}]
  %s5 = inlined_call_operand.hbm [shape: f32[32,128], index: 5, kind: output, shape index: {0}]
  %s6 = inlined_call_operand.hbm [shape: f32[2,2,128], index: 6, kind: output, shape index: {1}]
  %7 = xla_tuple %s5, %s6
  %s8 = sld [smem:[#allocation0]]
  $region50: #{tpu_custom_call.1} parent=0
    _
  %s10 = ssub.s32 1, %s8
  %s11 = scalar_select 0, %s10, %s8
  $region1: #{tpu_custom_call.1} parent=0
    #allocation5 [shape = 'u8[32768]{0}', space=vmem, size = 0x8000, scoped, tag = 'input window, operand 3, single buffered']
    #allocation6 [shape = 's32[1]{0}', space=sflag, size = 0x4, scoped, tag = 'scoped memory for tpu_custom_call.1']
    #allocation7 [shape = 's32[1]{0}', space=sflag, size = 0x4, scoped, tag = 'scoped memory for tpu_custom_call.1']
    #allocation8 [shape = 'u8[16384]{0}', space=vmem, size = 0x4000, scoped, tag = 'output window, operand 0, single buffered']
    #allocation9 [shape = 'u8[2048]{0}', space=vmem, size = 0x800, scoped, tag = 'output window, operand 1, single buffered']
    #allocation10 [shape = 's32[1]{0}', space=sflag, size = 0x4, scoped, tag = 'scoped memory for tpu_custom_call.1']
    %12 = vsyncpa [#allocation6], 0
    %13 = vsyncpa [#allocation7], 0
    %14 = vsyncpa [#allocation10], 0
    // Predicated region
    $region2: #{tpu_custom_call.1} parent=1 // pred_check
      _
    $region3: #{tpu_custom_call.1} parent=1 // pred_check_branch
      %16 = sbr.rel (0) target = $region5
    $region4: #{tpu_custom_call.1} parent=1 // pred_region
      %s17 = sadd.s32 0, 0
      %s18 = smul.u32 4, %s17
      %p19 = scmp.lt.s32.totalorder %s18, 3
      %s20 = scalar_select %p19, %s18, 3
      %s21 = smul.addr %s20, 8
      %s22 = scalar_lea.vmem %s0, %s21
      %s23 = sadd.s32 0, 0
      %s24 = smul.u32 4, %s23
    $region5: #{tpu_custom_call.1} parent=1 // pred_fallthru
      _
    // Predicated region
    $region6: #{tpu_custom_call.1} parent=1 // pred_check
      _
    $region7: #{tpu_custom_call.1} parent=1 // pred_check_branch
      %26 = sbr.rel (0) target = $region9
    $region8: #{tpu_custom_call.1} parent=1 // pred_region
      _
    $region9: #{tpu_custom_call.1} parent=1 // pred_fallthru
      _
    // Predicated region
    $region10: #{tpu_custom_call.1} parent=1 // pred_check
      _
    $region11: #{tpu_custom_call.1} parent=1 // pred_check_branch
      %28 = sbr.rel (0) target = $region13
    $region12: #{tpu_custom_call.1} parent=1 // pred_region
      _
    $region13: #{tpu_custom_call.1} parent=1 // pred_fallthru
      _
    // Predicated region
    $region14: #{tpu_custom_call.1} parent=1 // pred_check
      _
    $region15: #{tpu_custom_call.1} parent=1 // pred_check_branch
      %30 = sbr.rel (0) target = $region17
    $region16: #{tpu_custom_call.1} parent=1 // pred_region
      %32 = vsyncadd [#allocation6], 0
      %s33 = sshll.u32 %s3, 4
      %s34 = int_to_ptr.hbm [resolvable:$true] %s33
      %s35 = sshll.u32 [#allocation5], 4
      %s36 = int_to_ptr.vmem [resolvable:$true] %s35
      %41 = dma.hbm_to_vmem [thread:$0]  %s34, 1024, %s36, [#allocation6], 128, 128, 8
    $region17: #{tpu_custom_call.1} parent=1 // pred_fallthru
      _
    // Predicated region
    $region18: #{tpu_custom_call.1} parent=1 // pred_check
      _
    $region19: #{tpu_custom_call.1} parent=1 // pred_check_branch
      %43 = sbr.rel (0) target = $region21
    $region20: #{tpu_custom_call.1} parent=1 // pred_region
      _
    $region21: #{tpu_custom_call.1} parent=1 // pred_fallthru
      _
    // Predicated region
    $region22: #{tpu_custom_call.1} parent=1 // pred_check
      _
    $region23: #{tpu_custom_call.1} parent=1 // pred_check_branch
      %45 = sbr.rel (0) target = $region25
    $region24: #{tpu_custom_call.1} parent=1 // pred_region
      %47 = dma.done [#allocation6], 1024
    $region25: #{tpu_custom_call.1} parent=1 // pred_fallthru
      _
    %s48 = sadd.s32 0, 0
    %s49 = smul.u32 4, %s48
    %p50 = scmp.lt.s32.totalorder %s49, 3
    %s51 = scalar_select %p50, %s49, 3
    %s52 = smul.addr %s51, 8
    %s53 = scalar_lea.vmem %s0, %s52
    %s54 = sadd.s32 0, 0
    %s55 = smul.u32 4, %s54
    %p56 = scmp.lt.s32.totalorder %s55, 3
    %s57 = scalar_select %p56, %s55, 3
    %s58 = smul.addr %s57, 8
    %s59 = scalar_lea.vmem %s0, %s58
    %s60 = sadd.s32 0, 0
    %s61 = smul.u32 4, %s60
    %s62 = sadd.s32 0, 0
    %s63 = smul.u32 4, %s62
    %p64 = scmp.eq.s32.totalorder 0, 0
    // Predicated region
    $region26: #{tpu_custom_call.1} parent=1 // pred_check
      %p65 = pneg %p64
    $region27: #{tpu_custom_call.1} parent=1 // pred_check_branch
      %67 = sbr.rel (%p65) target = $region29
    $region28: #{tpu_custom_call.1} parent=1 // pred_region
      %68 = vst [vmem:[#allocation2] sm:$0x3] 0.0
      %69 = vst [vmem:[#allocation3] sm:$0x3] 0.0
      %vm70 = vcmask 1024
      %71 = vst.msk [vmem:[#allocation4] sm:$0x3] %vm70, 0.0
    $region29: #{tpu_custom_call.1} parent=1 // pred_fallthru
      _
    %v72 = vld [vmem:[%s59] sm:$0xff]
    %v73 = vld [vmem:[%s59 + $0x8] sm:$0xff]
    %v74 = vld [vmem:[%s59 + $0x10] sm:$0xff]
    %v75 = vld [vmem:[%s59 + $0x18] sm:$0xff]
    %v76 = vld [vmem:[%s1] sm:$0xff]
    %v77 = vld [vmem:[%s1 + $0x8] sm:$0xff]
    %v78 = vld [vmem:[%s1 + $0x10] sm:$0xff]
    %v79 = vld [vmem:[%s2] sm:$0x1]
    %v81 = vperm.slane %v79, 0
    %vm83 = vcmask 195584
    %v85 = vsel %vm83, %v72, 0
    %v88 = vsel %vm83, %v73, 0
    %v91 = vsel %vm83, %v74, 0
    %v94 = vsel %vm83, %v75, 0
    %96 = vmatpush.msra.mxu0 0.0
    %97 = vmatpush.msra.mxu0 0.0
    %98 = vmatpush.msra.mxu0 0.0
    %99 = vmatpush.msra.mxu0 0.0
    %100 = vmatpush.msra.mxu0 0.0
    %101 = vmatpush.msra.mxu0 0.0
    %102 = vmatpush.msra.mxu0 0.0
    %103 = vmatpush.msra.mxu0 0.0
    %104 = vmatpush.msra.mxu0 0.0
    %105 = vmatpush.msra.mxu0 0.0
    %106 = vmatpush.msra.mxu0 0.0
    %107 = vmatpush.msra.mxu0 0.0
    %108 = vmatpush.msra.mxu0 0.0
    %109 = vmatpush.msra.mxu0 %v78
    %110 = vmatpush.msra.mxu0 %v77
    %111 = vmatpush.msra.mxu0 %v76
    %112 = vmatmul.f32.gmra.mxu0 %v85
    %v113 = vpop.f32.mrf.mxu0
    %v114 = vadd.f32 %v81, %v113
    %115 = vmatmul.f32.gmra.mxu0 %v88
    %v116 = vpop.f32.mrf.mxu0
    %v117 = vadd.f32 %v81, %v116
    %118 = vmatmul.f32.gmra.mxu0 %v91
    %v119 = vpop.f32.mrf.mxu0
    %v120 = vadd.f32 %v81, %v119
    %121 = vmatmul.f32.gmra.mxu0 %v94
    %v122 = vpop.f32.mrf.mxu0
    %v123 = vadd.f32 %v81, %v122
    %124 = vdwg.mxu0
    %v125 = vmax.f32 %v114, 0.0
    %v126 = vmax.f32 %v117, 0.0
    %v127 = vmax.f32 %v120, 0.0
    %v128 = vmax.f32 %v123, 0.0
    %v129 = vld [vmem:[#allocation5] sm:$0xff]
    %v130 = vld [vmem:[#allocation5 + $0x8] sm:$0xff]
    %v131 = vld [vmem:[#allocation5 + $0x10] sm:$0xff]
    %v132 = vld [vmem:[#allocation5 + $0x18] sm:$0xff]
    %v133 = vld [vmem:[#allocation5 + $0x20] sm:$0xff]
    %v134 = vld [vmem:[#allocation5 + $0x28] sm:$0xff]
    %v135 = vld [vmem:[#allocation5 + $0x30] sm:$0xff]
    %v136 = vld [vmem:[#allocation5 + $0x38] sm:$0xff]
    %v137 = vld [vmem:[%s4] sm:$0x1]
    %v139 = vperm.slane %v137, 0
    %vm141 = vcmask 523264
    %v143 = vsel %vm141, %v125, 0
    %v146 = vsel %vm141, %v126, 0
    %v149 = vsel %vm141, %v127, 0
    %v152 = vsel %vm141, %v128, 0
    %154 = vmatpush.msra.mxu0 0.0
    %155 = vmatpush.msra.mxu0 0.0
    %156 = vmatpush.msra.mxu0 0.0
    %157 = vmatpush.msra.mxu0 0.0
    %158 = vmatpush.msra.mxu0 0.0
    %159 = vmatpush.msra.mxu0 0.0
    %160 = vmatpush.msra.mxu0 0.0
    %161 = vmatpush.msra.mxu0 0.0
    %162 = vmatpush.msra.mxu0 %v136
    %163 = vmatpush.msra.mxu0 %v135
    %164 = vmatpush.msra.mxu0 %v134
    %165 = vmatpush.msra.mxu0 %v133
    %166 = vmatpush.msra.mxu0 %v132
    %167 = vmatpush.msra.mxu0 %v131
    %168 = vmatpush.msra.mxu0 %v130
    %169 = vmatpush.msra.mxu0 %v129
    %170 = vmatmul.f32.gmra.mxu0 %v143
    %v171 = vpop.f32.mrf.mxu0
    %v172 = vadd.f32 %v139, %v171
    %173 = vmatmul.f32.gmra.mxu0 %v146
    %v174 = vpop.f32.mrf.mxu0
    %v175 = vadd.f32 %v139, %v174
    %176 = vmatmul.f32.gmra.mxu0 %v149
    %v177 = vpop.f32.mrf.mxu0
    %v178 = vadd.f32 %v139, %v177
    %179 = vmatmul.f32.gmra.mxu0 %v152
    %v180 = vpop.f32.mrf.mxu0
    %v181 = vadd.f32 %v139, %v180
    %182 = vdwg.mxu0
    %v183 = vxor.u32 %v172, 2147483648
    %v184 = vxor.u32 %v175, 2147483648
    %v185 = vxor.u32 %v178, 2147483648
    %v186 = vxor.u32 %v181, 2147483648
    %v187 = vmul.f32 %v183, 1.442695
    %v188 = vpow.pop %v187
    %v189 = vmul.f32 %v184, 1.442695
    %v190 = vpow.pop %v189
    %v191 = vmul.f32 %v185, 1.442695
    %v192 = vpow.pop %v191
    %v193 = vmul.f32 %v186, 1.442695
    %v194 = vpow.pop %v193
    %v195 = vadd.f32 %v188, 1.0
    %v196 = vadd.f32 %v190, 1.0
    %v197 = vadd.f32 %v192, 1.0
    %v198 = vadd.f32 %v194, 1.0
    %v199 = vrcp.pop %v195
    %v200 = vmul.f32 %v195, %v199
    %v201 = vsub.f32 1.0, %v200
    %v202 = vmul.f32 %v199, %v201
    %v203 = vadd.f32 %v199, %v202
    %vm204 = vweird.f32 %v195
    %vm205 = vweird.f32 %v199
    %vm206 = vmor %vm204, %vm205
    %v207 = vsel %vm206, %v199, %v203
    %v208 = vand.u32 2147483647, %v195
    %vm209 = vcmp.eq.f32.partialorder %v208, 8.507059e+37
    %v210 = vand.u32 %v195, 2147483648
    %v211 = vor.u32 1.1754944e-38, %v210
    %v212 = vsel %vm209, %v211, %v207
    %v213 = vmul.f32 1.0, %v212
    %v214 = vrcp.pop %v196
    %v215 = vmul.f32 %v196, %v214
    %v216 = vsub.f32 1.0, %v215
    %v217 = vmul.f32 %v214, %v216
    %v218 = vadd.f32 %v214, %v217
    %vm219 = vweird.f32 %v196
    %vm220 = vweird.f32 %v214
    %vm221 = vmor %vm219, %vm220
    %v222 = vsel %vm221, %v214, %v218
    %v223 = vand.u32 2147483647, %v196
    %vm224 = vcmp.eq.f32.partialorder %v223, 8.507059e+37
    %v225 = vand.u32 %v196, 2147483648
    %v226 = vor.u32 1.1754944e-38, %v225
    %v227 = vsel %vm224, %v226, %v222
    %v228 = vmul.f32 1.0, %v227
    %v229 = vrcp.pop %v197
    %v230 = vmul.f32 %v197, %v229
    %v231 = vsub.f32 1.0, %v230
    %v232 = vmul.f32 %v229, %v231
    %v233 = vadd.f32 %v229, %v232
    %vm234 = vweird.f32 %v197
    %vm235 = vweird.f32 %v229
    %vm236 = vmor %vm234, %vm235
    %v237 = vsel %vm236, %v229, %v233
    %v238 = vand.u32 2147483647, %v197
    %vm239 = vcmp.eq.f32.partialorder %v238, 8.507059e+37
    %v240 = vand.u32 %v197, 2147483648
    %v241 = vor.u32 1.1754944e-38, %v240
    %v242 = vsel %vm239, %v241, %v237
    %v243 = vmul.f32 1.0, %v242
    %v244 = vrcp.pop %v198
    %v245 = vmul.f32 %v198, %v244
    %v246 = vsub.f32 1.0, %v245
    %v247 = vmul.f32 %v244, %v246
    %v248 = vadd.f32 %v244, %v247
    %vm249 = vweird.f32 %v198
    %vm250 = vweird.f32 %v244
    %vm251 = vmor %vm249, %vm250
    %v252 = vsel %vm251, %v244, %v248
    %v253 = vand.u32 2147483647, %v198
    %vm254 = vcmp.eq.f32.partialorder %v253, 8.507059e+37
    %v255 = vand.u32 %v198, 2147483648
    %v256 = vor.u32 1.1754944e-38, %v255
    %v257 = vsel %vm254, %v256, %v252
    %v258 = vmul.f32 1.0, %v257
    %263 = vrot.lane.b32.xlu0 %v213, 127
    %v264 = vpop.permute.xlu0 %263
    %265 = vrot.lane.b32.xlu0 %v228, 127
    %v266 = vpop.permute.xlu0 %265
    %267 = vrot.lane.b32.xlu0 %v243, 127
    %v268 = vpop.permute.xlu0 %267
    %269 = vrot.lane.b32.xlu0 %v258, 127
    %v270 = vpop.permute.xlu0 %269
    %v275 = vadd.f32 %v213, %v264
    %v276 = vadd.f32 %v228, %v266
    %v277 = vadd.f32 %v243, %v268
    %v278 = vadd.f32 %v258, %v270
    %v279 = vmul.f32 %v275, 0.5
    %v280 = vmul.f32 %v276, 0.5
    %v281 = vmul.f32 %v277, 0.5
    %v282 = vmul.f32 %v278, 0.5
    %v283 = vlaneseq
    %v284 = vand.u32 %v283, 127
    %vm285 = vcmp.eq.s32.totalorder %v284, 6
    %287 = vset.pattern.permute.xlu0 6
    %288 = vperm.xlu0 %287, %v279
    %v289 = vpop.permute.xlu0 %288
    %292 = vset.pattern.permute.xlu0 6
    %293 = vperm.xlu0 %292, %v280
    %v294 = vpop.permute.xlu0 %293
    %297 = vset.pattern.permute.xlu0 6
    %298 = vperm.xlu0 %297, %v281
    %v299 = vpop.permute.xlu0 %298
    %302 = vset.pattern.permute.xlu0 6
    %303 = vperm.xlu0 %302, %v282
    %v304 = vpop.permute.xlu0 %303
    %v306 = vsel %vm285, %v289, %v172
    %v307 = vsel %vm285, %v294, %v175
    %v308 = vsel %vm285, %v299, %v178
    %v309 = vsel %vm285, %v304, %v181
    %310 = vst [vmem:[#allocation8] sm:$0xff] %v306
    %311 = vst [vmem:[#allocation8 + $0x8] sm:$0xff] %v307
    %312 = vst [vmem:[#allocation8 + $0x10] sm:$0xff] %v308
    %313 = vst [vmem:[#allocation8 + $0x18] sm:$0xff] %v309
    %v314 = vld [vmem:[#allocation2] sm:$0x3]
    %v315 = vmul.f32 %v172, %v289
    %v316 = vmul.f32 %v175, %v294
    %v317 = vmul.f32 %v178, %v299
    %v318 = vmul.f32 %v181, %v304
    %v319 = vadd.f32 %v315, %v316
    %v320 = vrot.slane %v319, 4
    %v321 = vadd.f32 %v319, %v320
    %v322 = vrot.slane %v321, 2
    %v323 = vadd.f32 %v321, %v322
    %v324 = vrot.slane %v323, 1
    %v325 = vadd.f32 %v323, %v324
    %v326 = vadd.f32 %v317, %v318
    %v327 = vrot.slane %v326, 4
    %v328 = vadd.f32 %v326, %v327
    %v329 = vrot.slane %v328, 2
    %v330 = vadd.f32 %v328, %v329
    %v331 = vrot.slane %v330, 1
    %v332 = vadd.f32 %v330, %v331
    %vm335 = vcmask 1041409
    %v336 = vsel %vm335, %v332, %v325
    %v338 = vadd.f32 %v314, %v336
    %339 = vst [vmem:[#allocation2] sm:$0x3] %v338
    %v340 = vld [vmem:[#allocation3] sm:$0x3]
    %v341 = vadd.f32 %v172, %v175
    %v342 = vrot.slane %v341, 4
    %v343 = vadd.f32 %v341, %v342
    %v344 = vrot.slane %v343, 2
    %v345 = vadd.f32 %v343, %v344
    %v346 = vrot.slane %v345, 1
    %v347 = vadd.f32 %v345, %v346
    %v348 = vadd.f32 %v178, %v181
    %v349 = vrot.slane %v348, 4
    %v350 = vadd.f32 %v348, %v349
    %v351 = vrot.slane %v350, 2
    %v352 = vadd.f32 %v350, %v351
    %v353 = vrot.slane %v352, 1
    %v354 = vadd.f32 %v352, %v353
    %v357 = vsel %vm335, %v354, %v347
    %v359 = vadd.f32 %v340, %v357
    %360 = vst [vmem:[#allocation3] sm:$0x3] %v359
    %v361 = vld [vmem:[#allocation4] sm:$0x3]
    %vm362 = vcmask 56368
    %v363 = vsel %vm362, %v279, 0.0
    %v364 = vsel %vm362, %v280, 0.0
    %v365 = vadd.f32 %v363, %v364
    %v366 = vrot.slane %v365, 4
    %v367 = vadd.f32 %v365, %v366
    %v368 = vrot.slane %v367, 2
    %v369 = vadd.f32 %v367, %v368
    %v370 = vrot.slane %v369, 1
    %v371 = vadd.f32 %v369, %v370
    %v372 = vsel %vm362, %v281, 0.0
    %v373 = vsel %vm362, %v282, 0.0
    %v374 = vadd.f32 %v372, %v373
    %v375 = vrot.slane %v374, 4
    %v376 = vadd.f32 %v374, %v375
    %v377 = vrot.slane %v376, 2
    %v378 = vadd.f32 %v376, %v377
    %v379 = vrot.slane %v378, 1
    %v380 = vadd.f32 %v378, %v379
    %v383 = vsel %vm335, %v380, %v371
    %384 = vrot.lane.b32.xlu0 %v383, 122
    %v385 = vpop.permute.xlu0 %384
    %v387 = vadd.f32 %v361, %v385
    %vm388 = vcmask 1024
    %389 = vst.msk [vmem:[#allocation4] sm:$0x3] %vm388, %v387
    // Predicated region
    $region30: #{tpu_custom_call.1} parent=1 // pred_check
      %p390 = pneg %p64
    $region31: #{tpu_custom_call.1} parent=1 // pred_check_branch
      %392 = sbr.rel (%p390) target = $region33
    $region32: #{tpu_custom_call.1} parent=1 // pred_region
      %v393 = vld [vmem:[#allocation4] sm:$0x3]
      %v394 = vld [vmem:[#allocation2] sm:$0x3]
      %v395 = vadd.f32 %v393, 1.0
      %397 = vset.pattern.permute.xlu0 0
      %398 = vperm.xlu0 %397, %v395
      %v399 = vpop.permute.xlu0 %398
      %v401 = vrcp.pop %v399
      %v402 = vmul.f32 %v399, %v401
      %v403 = vsub.f32 1.0, %v402
      %v404 = vmul.f32 %v401, %v403
      %v405 = vadd.f32 %v401, %v404
      %vm406 = vweird.f32 %v399
      %vm407 = vweird.f32 %v401
      %vm408 = vmor %vm406, %vm407
      %v409 = vsel %vm408, %v401, %v405
      %v410 = vand.u32 2147483647, %v399
      %vm411 = vcmp.eq.f32.partialorder %v410, 8.507059e+37
      %v412 = vand.u32 %v399, 2147483648
      %v413 = vor.u32 1.1754944e-38, %v412
      %v414 = vsel %vm411, %v413, %v409
      %v415 = vmul.f32 %v394, %v414
      %v416 = vld [vmem:[#allocation3] sm:$0x3]
      %v417 = vsub.f32 %v416, %v394
      %v418 = vsub.f32 16.0, %v393
      %v419 = vadd.f32 %v418, 1e-06
      %421 = vset.pattern.permute.xlu0 0
      %422 = vperm.xlu0 %421, %v419
      %v423 = vpop.permute.xlu0 %422
      %v425 = vrcp.pop %v423
      %v426 = vmul.f32 %v423, %v425
      %v427 = vsub.f32 1.0, %v426
      %v428 = vmul.f32 %v425, %v427
      %v429 = vadd.f32 %v425, %v428
      %vm430 = vweird.f32 %v423
      %vm431 = vweird.f32 %v425
      %vm432 = vmor %vm430, %vm431
      %v433 = vsel %vm432, %v425, %v429
      %v434 = vand.u32 2147483647, %v423
      %vm435 = vcmp.eq.f32.partialorder %v434, 8.507059e+37
      %v436 = vand.u32 %v423, 2147483648
      %v437 = vor.u32 1.1754944e-38, %v436
      %v438 = vsel %vm435, %v437, %v433
      %v439 = vmul.f32 %v417, %v438
      %v441 = vrot.slane %v415, 1
      %443 = vst [vmem:[#allocation9] sm:$0x1] %v415
      %444 = vst [vmem:[#allocation9 + $0x2] sm:$0x1] %v441
      %v446 = vrot.slane %v439, 1
      %448 = vst [vmem:[#allocation9 + $0x1] sm:$0x1] %v439
      %449 = vst [vmem:[#allocation9 + $0x3] sm:$0x1] %v446
    $region33: #{tpu_custom_call.1} parent=1 // pred_fallthru
      _
    // Predicated region
    $region34: #{tpu_custom_call.1} parent=1 // pred_check
      _
    $region35: #{tpu_custom_call.1} parent=1 // pred_check_branch
      %451 = sbr.rel (0) target = $region37
    $region36: #{tpu_custom_call.1} parent=1 // pred_region
      %s452 = sadd.s32 0, 0
      %s453 = smul.u32 4, %s452
      %455 = vsyncadd [#allocation7], 0
      %s456 = smul.addr %s453, 8
      %s457 = scalar_lea.hbm %s5, %s456
      %s458 = sshll.u32 [#allocation8], 4
      %s459 = int_to_ptr.vmem [resolvable:$true] %s458
      %s460 = sshll.u32 %s457, 4
      %s461 = int_to_ptr.hbm [resolvable:$true] %s460
      %466 = dma.vmem_to_hbm [thread:$0]  %s459, 512, %s461, [#allocation7], 128, 128, 8
    $region37: #{tpu_custom_call.1} parent=1 // pred_fallthru
      _
    // Predicated region
    $region38: #{tpu_custom_call.1} parent=1 // pred_check
      _
    $region39: #{tpu_custom_call.1} parent=1 // pred_check_branch
      %468 = sbr.rel (0) target = $region41
    $region40: #{tpu_custom_call.1} parent=1 // pred_region
      %470 = vsyncadd [#allocation10], 0
      %s471 = sshll.u32 [#allocation9], 4
      %s472 = int_to_ptr.vmem [resolvable:$true] %s471
      %s473 = sshll.u32 %s6, 4
      %s474 = int_to_ptr.hbm [resolvable:$true] %s473
      %479 = dma.vmem_to_hbm [thread:$0]  %s472, 64, %s474, [#allocation10], 32, 32, 2
    $region41: #{tpu_custom_call.1} parent=1 // pred_fallthru
      _
    // Predicated region
    $region42: #{tpu_custom_call.1} parent=1 // pred_check
      _
    $region43: #{tpu_custom_call.1} parent=1 // pred_check_branch
      %481 = sbr.rel (0) target = $region45
    $region44: #{tpu_custom_call.1} parent=1 // pred_region
      %483 = dma.done [#allocation7], 512
    $region45: #{tpu_custom_call.1} parent=1 // pred_fallthru
      _
    // Predicated region
    $region46: #{tpu_custom_call.1} parent=1 // pred_check
      _
    $region47: #{tpu_custom_call.1} parent=1 // pred_check_branch
      %485 = sbr.rel (0) target = $region49
    $region48: #{tpu_custom_call.1} parent=1 // pred_region
      %487 = dma.done [#allocation10], 64
    $region49: #{tpu_custom_call.1} parent=1 // pred_fallthru
      _
    %488 = vsyncpa [#allocation6], 1
    %489 = vsyncpa [#allocation7], 1
    %490 = vsyncpa [#allocation10], 1

// kernel: tpu_custom_call.1
$region0: #{tpu_custom_call.1}
  #allocation0 [shape = 'u32[]', space=smem, size = 0x4, offset = 0x4, fixed_abs, tag = 'smem constant byte address 0x4 - core index']
  #allocation1 [shape = 'u32[72,128]{1,0:T(1,128)}', space=vmem, size = 0x9000, scoped, tag = 'internal scratch']
  #allocation2 [shape = 'f32[2,128]{1,0:T(2,128)}', space=vmem, size = 0x400, scoped, tag = 'scratch operand']
  #allocation3 [shape = 'f32[2,128]{1,0:T(2,128)}', space=vmem, size = 0x400, scoped, tag = 'scratch operand']
  #allocation4 [shape = 'f32[2,1]{1,0:T(2,128)}', space=vmem, size = 0x400, scoped, tag = 'scratch operand']
  %s0 = inlined_call_operand.vmem [shape: f32[32,24], index: 0, kind: input, shape index: {}]
  %s1 = inlined_call_operand.vmem [shape: f32[24,64], index: 1, kind: input, shape index: {}]
  %s2 = inlined_call_operand.vmem [shape: f32[1,64], index: 2, kind: input, shape index: {}]
  %s3 = inlined_call_operand.hbm [shape: f32[64,128], index: 3, kind: input, shape index: {}]
  %s4 = inlined_call_operand.vmem [shape: f32[1,128], index: 4, kind: input, shape index: {}]
  %s5 = inlined_call_operand.hbm [shape: f32[32,128], index: 5, kind: output, shape index: {0}]
  %s6 = inlined_call_operand.hbm [shape: f32[2,2,128], index: 6, kind: output, shape index: {1}]
  %7 = xla_tuple %s5, %s6
  %s8 = sld [smem:[#allocation0]]
  $region50: #{tpu_custom_call.1} parent=0
    _
  %s10 = ssub.s32 1, %s8
  %s11 = scalar_select 0, %s10, %s8
  $region1: #{tpu_custom_call.1} parent=0
    #allocation5 [shape = 'u8[32768]{0}', space=vmem, size = 0x8000, scoped, tag = 'input window, operand 3, single buffered']
    #allocation6 [shape = 's32[1]{0}', space=sflag, size = 0x4, scoped, tag = 'scoped memory for tpu_custom_call.1']
    #allocation7 [shape = 's32[1]{0}', space=sflag, size = 0x4, scoped, tag = 'scoped memory for tpu_custom_call.1']
    #allocation8 [shape = 'u8[16384]{0}', space=vmem, size = 0x4000, scoped, tag = 'output window, operand 0, single buffered']
    #allocation9 [shape = 'u8[2048]{0}', space=vmem, size = 0x800, scoped, tag = 'output window, operand 1, single buffered']
    #allocation10 [shape = 's32[1]{0}', space=sflag, size = 0x4, scoped, tag = 'scoped memory for tpu_custom_call.1']
    %12 = vsyncpa [#allocation6], 0
    %13 = vsyncpa [#allocation7], 0
    %14 = vsyncpa [#allocation10], 0
    // Predicated region
    $region2: #{tpu_custom_call.1} parent=1 // pred_check
      _
    $region3: #{tpu_custom_call.1} parent=1 // pred_check_branch
      %16 = sbr.rel (0) target = $region5
    $region4: #{tpu_custom_call.1} parent=1 // pred_region
      %s17 = sadd.s32 0, 0
      %s18 = smul.u32 4, %s17
      %p19 = scmp.lt.s32.totalorder %s18, 3
      %s20 = scalar_select %p19, %s18, 3
      %s21 = smul.addr %s20, 8
      %s22 = scalar_lea.vmem %s0, %s21
      %s23 = sadd.s32 0, 0
      %s24 = smul.u32 4, %s23
    $region5: #{tpu_custom_call.1} parent=1 // pred_fallthru
      _
    // Predicated region
    $region6: #{tpu_custom_call.1} parent=1 // pred_check
      _
    $region7: #{tpu_custom_call.1} parent=1 // pred_check_branch
      %26 = sbr.rel (0) target = $region9
    $region8: #{tpu_custom_call.1} parent=1 // pred_region
      _
    $region9: #{tpu_custom_call.1} parent=1 // pred_fallthru
      _
    // Predicated region
    $region10: #{tpu_custom_call.1} parent=1 // pred_check
      _
    $region11: #{tpu_custom_call.1} parent=1 // pred_check_branch
      %28 = sbr.rel (0) target = $region13
    $region12: #{tpu_custom_call.1} parent=1 // pred_region
      _
    $region13: #{tpu_custom_call.1} parent=1 // pred_fallthru
      _
    // Predicated region
    $region14: #{tpu_custom_call.1} parent=1 // pred_check
      _
    $region15: #{tpu_custom_call.1} parent=1 // pred_check_branch
      %30 = sbr.rel (0) target = $region17
    $region16: #{tpu_custom_call.1} parent=1 // pred_region
      %32 = vsyncadd [#allocation6], 0
      %s33 = sshll.u32 %s3, 4
      %s34 = int_to_ptr.hbm [resolvable:$true] %s33
      %s35 = sshll.u32 [#allocation5], 4
      %s36 = int_to_ptr.vmem [resolvable:$true] %s35
      %41 = dma.hbm_to_vmem [thread:$0]  %s34, 1024, %s36, [#allocation6], 128, 128, 8
    $region17: #{tpu_custom_call.1} parent=1 // pred_fallthru
      _
    // Predicated region
    $region18: #{tpu_custom_call.1} parent=1 // pred_check
      _
    $region19: #{tpu_custom_call.1} parent=1 // pred_check_branch
      %43 = sbr.rel (0) target = $region21
    $region20: #{tpu_custom_call.1} parent=1 // pred_region
      _
    $region21: #{tpu_custom_call.1} parent=1 // pred_fallthru
      _
    // Predicated region
    $region22: #{tpu_custom_call.1} parent=1 // pred_check
      _
    $region23: #{tpu_custom_call.1} parent=1 // pred_check_branch
      %45 = sbr.rel (0) target = $region25
    $region24: #{tpu_custom_call.1} parent=1 // pred_region
      %47 = dma.done [#allocation6], 1024
    $region25: #{tpu_custom_call.1} parent=1 // pred_fallthru
      _
    %s48 = sadd.s32 0, 0
    %s49 = smul.u32 4, %s48
    %p50 = scmp.lt.s32.totalorder %s49, 3
    %s51 = scalar_select %p50, %s49, 3
    %s52 = smul.addr %s51, 8
    %s53 = scalar_lea.vmem %s0, %s52
    %s54 = sadd.s32 0, 0
    %s55 = smul.u32 4, %s54
    %p56 = scmp.lt.s32.totalorder %s55, 3
    %s57 = scalar_select %p56, %s55, 3
    %s58 = smul.addr %s57, 8
    %s59 = scalar_lea.vmem %s0, %s58
    %s60 = sadd.s32 0, 0
    %s61 = smul.u32 4, %s60
    %s62 = sadd.s32 0, 0
    %s63 = smul.u32 4, %s62
    %p64 = scmp.eq.s32.totalorder 0, 0
    // Predicated region
    $region26: #{tpu_custom_call.1} parent=1 // pred_check
      %p65 = pneg %p64
    $region27: #{tpu_custom_call.1} parent=1 // pred_check_branch
      %67 = sbr.rel (%p65) target = $region29
    $region28: #{tpu_custom_call.1} parent=1 // pred_region
      %68 = vst [vmem:[#allocation2] sm:$0x3] 0.0
      %69 = vst [vmem:[#allocation3] sm:$0x3] 0.0
      %vm70 = vcmask 1024
      %71 = vst.msk [vmem:[#allocation4] sm:$0x3] %vm70, 0.0
    $region29: #{tpu_custom_call.1} parent=1 // pred_fallthru
      _
    %v72 = vld [vmem:[%s59] sm:$0xff]
    %v73 = vld [vmem:[%s59 + $0x8] sm:$0xff]
    %v74 = vld [vmem:[%s59 + $0x10] sm:$0xff]
    %v75 = vld [vmem:[%s59 + $0x18] sm:$0xff]
    %v76 = vld [vmem:[%s1] sm:$0xff]
    %v77 = vld [vmem:[%s1 + $0x8] sm:$0xff]
    %v78 = vld [vmem:[%s1 + $0x10] sm:$0xff]
    %v79 = vld [vmem:[%s2] sm:$0x1]
    %v81 = vperm.slane %v79, 0
    %vm83 = vcmask 195584
    %v85 = vsel %vm83, %v72, 0
    %v88 = vsel %vm83, %v73, 0
    %v91 = vsel %vm83, %v74, 0
    %v94 = vsel %vm83, %v75, 0
    %96 = vmatpush.msra.mxu0 0.0
    %97 = vmatpush.msra.mxu0 0.0
    %98 = vmatpush.msra.mxu0 0.0
    %99 = vmatpush.msra.mxu0 0.0
    %100 = vmatpush.msra.mxu0 0.0
    %101 = vmatpush.msra.mxu0 0.0
    %102 = vmatpush.msra.mxu0 0.0
    %103 = vmatpush.msra.mxu0 0.0
    %104 = vmatpush.msra.mxu0 0.0
    %105 = vmatpush.msra.mxu0 0.0
    %106 = vmatpush.msra.mxu0 0.0
    %107 = vmatpush.msra.mxu0 0.0
    %108 = vmatpush.msra.mxu0 0.0
    %109 = vmatpush.msra.mxu0 %v78
    %110 = vmatpush.msra.mxu0 %v77
    %111 = vmatpush.msra.mxu0 %v76
    %112 = vmatmul.f32.gmra.mxu0 %v85
    %v113 = vpop.f32.mrf.mxu0
    %v114 = vadd.f32 %v81, %v113
    %115 = vmatmul.f32.gmra.mxu0 %v88
    %v116 = vpop.f32.mrf.mxu0
    %v117 = vadd.f32 %v81, %v116
    %118 = vmatmul.f32.gmra.mxu0 %v91
    %v119 = vpop.f32.mrf.mxu0
    %v120 = vadd.f32 %v81, %v119
    %121 = vmatmul.f32.gmra.mxu0 %v94
    %v122 = vpop.f32.mrf.mxu0
    %v123 = vadd.f32 %v81, %v122
    %124 = vdwg.mxu0
    %v125 = vmax.f32 %v114, 0.0
    %v126 = vmax.f32 %v117, 0.0
    %v127 = vmax.f32 %v120, 0.0
    %v128 = vmax.f32 %v123, 0.0
    %v129 = vld [vmem:[#allocation5] sm:$0xff]
    %v130 = vld [vmem:[#allocation5 + $0x8] sm:$0xff]
    %v131 = vld [vmem:[#allocation5 + $0x10] sm:$0xff]
    %v132 = vld [vmem:[#allocation5 + $0x18] sm:$0xff]
    %v133 = vld [vmem:[#allocation5 + $0x20] sm:$0xff]
    %v134 = vld [vmem:[#allocation5 + $0x28] sm:$0xff]
    %v135 = vld [vmem:[#allocation5 + $0x30] sm:$0xff]
    %v136 = vld [vmem:[#allocation5 + $0x38] sm:$0xff]
    %v137 = vld [vmem:[%s4] sm:$0x1]
    %v139 = vperm.slane %v137, 0
    %vm141 = vcmask 523264
    %v143 = vsel %vm141, %v125, 0
    %v146 = vsel %vm141, %v126, 0
    %v149 = vsel %vm141, %v127, 0
    %v152 = vsel %vm141, %v128, 0
    %154 = vmatpush.msra.mxu0 0.0
    %155 = vmatpush.msra.mxu0 0.0
    %156 = vmatpush.msra.mxu0 0.0
    %157 = vmatpush.msra.mxu0 0.0
    %158 = vmatpush.msra.mxu0 0.0
    %159 = vmatpush.msra.mxu0 0.0
    %160 = vmatpush.msra.mxu0 0.0
    %161 = vmatpush.msra.mxu0 0.0
    %162 = vmatpush.msra.mxu0 %v136
    %163 = vmatpush.msra.mxu0 %v135
    %164 = vmatpush.msra.mxu0 %v134
    %165 = vmatpush.msra.mxu0 %v133
    %166 = vmatpush.msra.mxu0 %v132
    %167 = vmatpush.msra.mxu0 %v131
    %168 = vmatpush.msra.mxu0 %v130
    %169 = vmatpush.msra.mxu0 %v129
    %170 = vmatmul.f32.gmra.mxu0 %v143
    %v171 = vpop.f32.mrf.mxu0
    %v172 = vadd.f32 %v139, %v171
    %173 = vmatmul.f32.gmra.mxu0 %v146
    %v174 = vpop.f32.mrf.mxu0
    %v175 = vadd.f32 %v139, %v174
    %176 = vmatmul.f32.gmra.mxu0 %v149
    %v177 = vpop.f32.mrf.mxu0
    %v178 = vadd.f32 %v139, %v177
    %179 = vmatmul.f32.gmra.mxu0 %v152
    %v180 = vpop.f32.mrf.mxu0
    %v181 = vadd.f32 %v139, %v180
    %182 = vdwg.mxu0
    %v183 = vxor.u32 %v172, 2147483648
    %v184 = vxor.u32 %v175, 2147483648
    %v185 = vxor.u32 %v178, 2147483648
    %v186 = vxor.u32 %v181, 2147483648
    %v187 = vmul.f32 %v183, 1.442695
    %v188 = vpow.pop %v187
    %v189 = vmul.f32 %v184, 1.442695
    %v190 = vpow.pop %v189
    %v191 = vmul.f32 %v185, 1.442695
    %v192 = vpow.pop %v191
    %v193 = vmul.f32 %v186, 1.442695
    %v194 = vpow.pop %v193
    %v195 = vadd.f32 %v188, 1.0
    %v196 = vadd.f32 %v190, 1.0
    %v197 = vadd.f32 %v192, 1.0
    %v198 = vadd.f32 %v194, 1.0
    %v199 = vrcp.pop %v195
    %v200 = vmul.f32 %v195, %v199
    %v201 = vsub.f32 1.0, %v200
    %v202 = vmul.f32 %v199, %v201
    %v203 = vadd.f32 %v199, %v202
    %vm204 = vweird.f32 %v195
    %vm205 = vweird.f32 %v199
    %vm206 = vmor %vm204, %vm205
    %v207 = vsel %vm206, %v199, %v203
    %v208 = vand.u32 2147483647, %v195
    %vm209 = vcmp.eq.f32.partialorder %v208, 8.507059e+37
    %v210 = vand.u32 %v195, 2147483648
    %v211 = vor.u32 1.1754944e-38, %v210
    %v212 = vsel %vm209, %v211, %v207
    %v213 = vmul.f32 1.0, %v212
    %v214 = vrcp.pop %v196
    %v215 = vmul.f32 %v196, %v214
    %v216 = vsub.f32 1.0, %v215
    %v217 = vmul.f32 %v214, %v216
    %v218 = vadd.f32 %v214, %v217
    %vm219 = vweird.f32 %v196
    %vm220 = vweird.f32 %v214
    %vm221 = vmor %vm219, %vm220
    %v222 = vsel %vm221, %v214, %v218
    %v223 = vand.u32 2147483647, %v196
    %vm224 = vcmp.eq.f32.partialorder %v223, 8.507059e+37
    %v225 = vand.u32 %v196, 2147483648
    %v226 = vor.u32 1.1754944e-38, %v225
    %v227 = vsel %vm224, %v226, %v222
    %v228 = vmul.f32 1.0, %v227
    %v229 = vrcp.pop %v197
    %v230 = vmul.f32 %v197, %v229
    %v231 = vsub.f32 1.0, %v230
    %v232 = vmul.f32 %v229, %v231
    %v233 = vadd.f32 %v229, %v232
    %vm234 = vweird.f32 %v197
    %vm235 = vweird.f32 %v229
    %vm236 = vmor %vm234, %vm235
    %v237 = vsel %vm236, %v229, %v233
    %v238 = vand.u32 2147483647, %v197
    %vm239 = vcmp.eq.f32.partialorder %v238, 8.507059e+37
    %v240 = vand.u32 %v197, 2147483648
    %v241 = vor.u32 1.1754944e-38, %v240
    %v242 = vsel %vm239, %v241, %v237
    %v243 = vmul.f32 1.0, %v242
    %v244 = vrcp.pop %v198
    %v245 = vmul.f32 %v198, %v244
    %v246 = vsub.f32 1.0, %v245
    %v247 = vmul.f32 %v244, %v246
    %v248 = vadd.f32 %v244, %v247
    %vm249 = vweird.f32 %v198
    %vm250 = vweird.f32 %v244
    %vm251 = vmor %vm249, %vm250
    %v252 = vsel %vm251, %v244, %v248
    %v253 = vand.u32 2147483647, %v198
    %vm254 = vcmp.eq.f32.partialorder %v253, 8.507059e+37
    %v255 = vand.u32 %v198, 2147483648
    %v256 = vor.u32 1.1754944e-38, %v255
    %v257 = vsel %vm254, %v256, %v252
    %v258 = vmul.f32 1.0, %v257
    %263 = vrot.lane.b32.xlu0 %v213, 127
    %v264 = vpop.permute.xlu0 %263
    %265 = vrot.lane.b32.xlu0 %v228, 127
    %v266 = vpop.permute.xlu0 %265
    %267 = vrot.lane.b32.xlu0 %v243, 127
    %v268 = vpop.permute.xlu0 %267
    %269 = vrot.lane.b32.xlu0 %v258, 127
    %v270 = vpop.permute.xlu0 %269
    %v275 = vadd.f32 %v213, %v264
    %v276 = vadd.f32 %v228, %v266
    %v277 = vadd.f32 %v243, %v268
    %v278 = vadd.f32 %v258, %v270
    %v279 = vmul.f32 %v275, 0.5
    %v280 = vmul.f32 %v276, 0.5
    %v281 = vmul.f32 %v277, 0.5
    %v282 = vmul.f32 %v278, 0.5
    %v283 = vlaneseq
    %v284 = vand.u32 %v283, 127
    %vm285 = vcmp.eq.s32.totalorder %v284, 6
    %287 = vset.pattern.permute.xlu0 6
    %288 = vperm.xlu0 %287, %v279
    %v289 = vpop.permute.xlu0 %288
    %292 = vset.pattern.permute.xlu0 6
    %293 = vperm.xlu0 %292, %v280
    %v294 = vpop.permute.xlu0 %293
    %297 = vset.pattern.permute.xlu0 6
    %298 = vperm.xlu0 %297, %v281
    %v299 = vpop.permute.xlu0 %298
    %302 = vset.pattern.permute.xlu0 6
    %303 = vperm.xlu0 %302, %v282
    %v304 = vpop.permute.xlu0 %303
    %v306 = vsel %vm285, %v289, %v172
    %v307 = vsel %vm285, %v294, %v175
    %v308 = vsel %vm285, %v299, %v178
    %v309 = vsel %vm285, %v304, %v181
    %310 = vst [vmem:[#allocation8] sm:$0xff] %v306
    %311 = vst [vmem:[#allocation8 + $0x8] sm:$0xff] %v307
    %312 = vst [vmem:[#allocation8 + $0x10] sm:$0xff] %v308
    %313 = vst [vmem:[#allocation8 + $0x18] sm:$0xff] %v309
    %v314 = vld [vmem:[#allocation2] sm:$0x3]
    %v315 = vmul.f32 %v172, %v289
    %v316 = vmul.f32 %v175, %v294
    %v317 = vmul.f32 %v178, %v299
    %v318 = vmul.f32 %v181, %v304
    %v319 = vadd.f32 %v315, %v316
    %v320 = vrot.slane %v319, 4
    %v321 = vadd.f32 %v319, %v320
    %v322 = vrot.slane %v321, 2
    %v323 = vadd.f32 %v321, %v322
    %v324 = vrot.slane %v323, 1
    %v325 = vadd.f32 %v323, %v324
    %v326 = vadd.f32 %v317, %v318
    %v327 = vrot.slane %v326, 4
    %v328 = vadd.f32 %v326, %v327
    %v329 = vrot.slane %v328, 2
    %v330 = vadd.f32 %v328, %v329
    %v331 = vrot.slane %v330, 1
    %v332 = vadd.f32 %v330, %v331
    %vm335 = vcmask 1041409
    %v336 = vsel %vm335, %v332, %v325
    %v338 = vadd.f32 %v314, %v336
    %339 = vst [vmem:[#allocation2] sm:$0x3] %v338
    %v340 = vld [vmem:[#allocation3] sm:$0x3]
    %v341 = vadd.f32 %v172, %v175
    %v342 = vrot.slane %v341, 4
    %v343 = vadd.f32 %v341, %v342
    %v344 = vrot.slane %v343, 2
    %v345 = vadd.f32 %v343, %v344
    %v346 = vrot.slane %v345, 1
    %v347 = vadd.f32 %v345, %v346
    %v348 = vadd.f32 %v178, %v181
    %v349 = vrot.slane %v348, 4
    %v350 = vadd.f32 %v348, %v349
    %v351 = vrot.slane %v350, 2
    %v352 = vadd.f32 %v350, %v351
    %v353 = vrot.slane %v352, 1
    %v354 = vadd.f32 %v352, %v353
    %v357 = vsel %vm335, %v354, %v347
    %v359 = vadd.f32 %v340, %v357
    %360 = vst [vmem:[#allocation3] sm:$0x3] %v359
    %v361 = vld [vmem:[#allocation4] sm:$0x3]
    %vm362 = vcmask 56368
    %v363 = vsel %vm362, %v279, 0.0
    %v364 = vsel %vm362, %v280, 0.0
    %v365 = vadd.f32 %v363, %v364
    %v366 = vrot.slane %v365, 4
    %v367 = vadd.f32 %v365, %v366
    %v368 = vrot.slane %v367, 2
    %v369 = vadd.f32 %v367, %v368
    %v370 = vrot.slane %v369, 1
    %v371 = vadd.f32 %v369, %v370
    %v372 = vsel %vm362, %v281, 0.0
    %v373 = vsel %vm362, %v282, 0.0
    %v374 = vadd.f32 %v372, %v373
    %v375 = vrot.slane %v374, 4
    %v376 = vadd.f32 %v374, %v375
    %v377 = vrot.slane %v376, 2
    %v378 = vadd.f32 %v376, %v377
    %v379 = vrot.slane %v378, 1
    %v380 = vadd.f32 %v378, %v379
    %v383 = vsel %vm335, %v380, %v371
    %384 = vrot.lane.b32.xlu0 %v383, 122
    %v385 = vpop.permute.xlu0 %384
    %v387 = vadd.f32 %v361, %v385
    %vm388 = vcmask 1024
    %389 = vst.msk [vmem:[#allocation4] sm:$0x3] %vm388, %v387
    // Predicated region
    $region30: #{tpu_custom_call.1} parent=1 // pred_check
      %p390 = pneg %p64
    $region31: #{tpu_custom_call.1} parent=1 // pred_check_branch
      %392 = sbr.rel (%p390) target = $region33
    $region32: #{tpu_custom_call.1} parent=1 // pred_region
      %v393 = vld [vmem:[#allocation4] sm:$0x3]
      %v394 = vld [vmem:[#allocation2] sm:$0x3]
      %v395 = vadd.f32 %v393, 1.0
      %397 = vset.pattern.permute.xlu0 0
      %398 = vperm.xlu0 %397, %v395
      %v399 = vpop.permute.xlu0 %398
      %v401 = vrcp.pop %v399
      %v402 = vmul.f32 %v399, %v401
      %v403 = vsub.f32 1.0, %v402
      %v404 = vmul.f32 %v401, %v403
      %v405 = vadd.f32 %v401, %v404
      %vm406 = vweird.f32 %v399
      %vm407 = vweird.f32 %v401
      %vm408 = vmor %vm406, %vm407
      %v409 = vsel %vm408, %v401, %v405
      %v410 = vand.u32 2147483647, %v399
      %vm411 = vcmp.eq.f32.partialorder %v410, 8.507059e+37
      %v412 = vand.u32 %v399, 2147483648
      %v413 = vor.u32 1.1754944e-38, %v412
      %v414 = vsel %vm411, %v413, %v409
      %v415 = vmul.f32 %v394, %v414
      %v416 = vld [vmem:[#allocation3] sm:$0x3]
      %v417 = vsub.f32 %v416, %v394
      %v418 = vsub.f32 16.0, %v393
      %v419 = vadd.f32 %v418, 1e-06
      %421 = vset.pattern.permute.xlu0 0
      %422 = vperm.xlu0 %421, %v419
      %v423 = vpop.permute.xlu0 %422
      %v425 = vrcp.pop %v423
      %v426 = vmul.f32 %v423, %v425
      %v427 = vsub.f32 1.0, %v426
      %v428 = vmul.f32 %v425, %v427
      %v429 = vadd.f32 %v425, %v428
      %vm430 = vweird.f32 %v423
      %vm431 = vweird.f32 %v425
      %vm432 = vmor %vm430, %vm431
      %v433 = vsel %vm432, %v425, %v429
      %v434 = vand.u32 2147483647, %v423
      %vm435 = vcmp.eq.f32.partialorder %v434, 8.507059e+37
      %v436 = vand.u32 %v423, 2147483648
      %v437 = vor.u32 1.1754944e-38, %v436
      %v438 = vsel %vm435, %v437, %v433
      %v439 = vmul.f32 %v417, %v438
      %v441 = vrot.slane %v415, 1
      %443 = vst [vmem:[#allocation9] sm:$0x1] %v415
      %444 = vst [vmem:[#allocation9 + $0x2] sm:$0x1] %v441
      %v446 = vrot.slane %v439, 1
      %448 = vst [vmem:[#allocation9 + $0x1] sm:$0x1] %v439
      %449 = vst [vmem:[#allocation9 + $0x3] sm:$0x1] %v446
    $region33: #{tpu_custom_call.1} parent=1 // pred_fallthru
      _
    // Predicated region
    $region34: #{tpu_custom_call.1} parent=1 // pred_check
      _
    $region35: #{tpu_custom_call.1} parent=1 // pred_check_branch
      %451 = sbr.rel (0) target = $region37
    $region36: #{tpu_custom_call.1} parent=1 // pred_region
      %s452 = sadd.s32 0, 0
      %s453 = smul.u32 4, %s452
      %455 = vsyncadd [#allocation7], 0
      %s456 = smul.addr %s453, 8
      %s457 = scalar_lea.hbm %s5, %s456
      %s458 = sshll.u32 [#allocation8], 4
      %s459 = int_to_ptr.vmem [resolvable:$true] %s458
      %s460 = sshll.u32 %s457, 4
      %s461 = int_to_ptr.hbm [resolvable:$true] %s460
      %466 = dma.vmem_to_hbm [thread:$0]  %s459, 512, %s461, [#allocation7], 128, 128, 8
    $region37: #{tpu_custom_call.1} parent=1 // pred_fallthru
      _
    // Predicated region
    $region38: #{tpu_custom_call.1} parent=1 // pred_check
      _
    $region39: #{tpu_custom_call.1} parent=1 // pred_check_branch
      %468 = sbr.rel (0) target = $region41
    $region40: #{tpu_custom_call.1} parent=1 // pred_region
      %470 = vsyncadd [#allocation10], 0
      %s471 = sshll.u32 [#allocation9], 4
      %s472 = int_to_ptr.vmem [resolvable:$true] %s471
      %s473 = sshll.u32 %s6, 4
      %s474 = int_to_ptr.hbm [resolvable:$true] %s473
      %479 = dma.vmem_to_hbm [thread:$0]  %s472, 64, %s474, [#allocation10], 32, 32, 2
    $region41: #{tpu_custom_call.1} parent=1 // pred_fallthru
      _
    // Predicated region
    $region42: #{tpu_custom_call.1} parent=1 // pred_check
      _
    $region43: #{tpu_custom_call.1} parent=1 // pred_check_branch
      %481 = sbr.rel (0) target = $region45
    $region44: #{tpu_custom_call.1} parent=1 // pred_region
      %483 = dma.done [#allocation7], 512
    $region45: #{tpu_custom_call.1} parent=1 // pred_fallthru
      _
    // Predicated region
    $region46: #{tpu_custom_call.1} parent=1 // pred_check
      _
    $region47: #{tpu_custom_call.1} parent=1 // pred_check_branch
      %485 = sbr.rel (0) target = $region49
    $region48: #{tpu_custom_call.1} parent=1 // pred_region
      %487 = dma.done [#allocation10], 64
    $region49: #{tpu_custom_call.1} parent=1 // pred_fallthru
      _
    %488 = vsyncpa [#allocation6], 1
    %489 = vsyncpa [#allocation7], 1
    %490 = vsyncpa [#allocation10], 1

</llo_original>
